<compile_context>
chip_gen: v7x
topology: tpu7x:2x2x1
jax: 0.10.0
libtpu: 0.0.40
codegen_flags: <defaults>
</compile_context>

<pallas_src>
import jax
import jax.numpy as jnp
from jax import lax
from jax.experimental import pallas as pl
from jax.experimental.pallas import tpu as pltpu


_FMA_MAX_K = 32  # contractions with K <= this use unrolled VPU FMAs, else bf16 MXU


def _vmem_capacity_bytes():
    try:
        return int(pltpu.get_tpu_info().vmem_capacity_bytes)
    except Exception:
        return 64 * 1024 * 1024  # conservative default (v7x per-core VMEM)


def _pick_row_tile(Ho, Wp, hidden, stride, k, n_batch, vmem_budget):
    """Largest divisor of Ho whose per-tile working set fits `vmem_budget`,
    while keeping enough grid steps (~>=8 total) to amortize per-step overhead
    and give the pipeline room to double-buffer."""
    want_r = max(1, -(-8 // max(n_batch, 1)))      # ceil(8 / N) row tiles desired
    cap = max(1, Ho // want_r)
    best = 1
    for cand in range(1, Ho + 1):
        if Ho % cand:
            continue
        trin = cand * stride + k - 1
        est = (k + 3) * trin * Wp * hidden * 4      # t + k shifted copies + acc (f32)
        if est <= vmem_budget and cand <= cap:
            best = max(best, cand)
    return best


def _make_kernel(H, W, Cin, Cout, hidden, k, stride, use_res, TRo):
    p = k // 2
    s = stride
    Wp = W + 2 * p
    Ho = (H + 2 * p - k) // s + 1
    Wo = (W + 2 * p - k) // s + 1
    TRin = TRo * s + k - 1              # padded input rows needed per output tile
    need_dw = (s != 1) and use_res

    def conv1x1(xin, w, scale_ref, bias_ref):
        """xin: (A, B, K) f32 value, w: (K, Nout) value.  BN folded as scale/bias."""
        K, Nout = w.shape
        if K <= _FMA_MAX_K:
            # VPU broadcast-FMA path (tiny K would waste the MXU).
            out = xin[:, :, 0:1] * w[0, :]
            for c in range(1, K):
                out = out + xin[:, :, c:c + 1] * w[c, :]
        else:
            A, B, _ = xin.shape
            out = jnp.dot(xin.reshape(A * B, K).astype(jnp.bfloat16),
                          w.astype(jnp.bfloat16),
                          preferred_element_type=jnp.float32).reshape(A, B, Nout)
        return out * scale_ref[...] + bias_ref[...]

    def kernel(*refs):
        if need_dw:
            (x_ref, w1_ref, s1_ref, b1_ref, wdw_ref, s2_ref, b2_ref,
             w2_ref, s3_ref, b3_ref, wd_ref, bd_ref, o_ref) = refs
        else:
            (x_ref, w1_ref, s1_ref, b1_ref, wdw_ref, s2_ref, b2_ref,
             w2_ref, s3_ref, b3_ref, o_ref) = refs

        r = pl.program_id(1)
        row0 = r * (TRo * s)                        # tile top, padded coordinates
        xw = x_ref[pl.ds(row0, TRin), :, :]         # (TRin, Wp, Cin), borders are 0

        # ---- 1x1 expand conv + BN + ReLU ---------------------------------
        t3 = jnp.maximum(conv1x1(xw, w1_ref[...], s1_ref, b1_ref), 0.0)

        # The depthwise conv must see zeros in the spatial padding region, but
        # the bias/ReLU made it ReLU(b1) there -> mask it back to zero.
        rows = lax.broadcasted_iota(jnp.int32, (TRin, Wp, hidden), 0) + row0
        cols = lax.broadcasted_iota(jnp.int32, (TRin, Wp, hidden), 1)
        valid = (rows >= p) & (rows < H + p) & (cols >= p) & (cols < W + p)
        t3 = jnp.where(valid, t3, 0.0)

        # ---- depthwise k x k conv + BN + ReLU ----------------------------
        wdw = wdw_ref[...]                          # (k, k, hidden)
        acc = jnp.zeros((TRo, Wo, hidden), jnp.float32)
        for dx in range(k):
            if s == 1:
                col = t3[:, dx:dx + Wo, :]          # one shifted copy per dx
                for dy in range(k):
                    acc = acc + col[dy:dy + TRo, :, :] * wdw[dy, dx, :]
            else:
                # stride > 1: evaluate only at the output positions.
                col = t3[:, dx:dx + Wo * s, :]
                col = col.reshape(TRin, Wo, s, hidden)[:, :, 0, :]
                for dy in range(k):
                    rsel = col[dy:dy + TRo * s, :, :]
                    rsel = rsel.reshape(TRo, s, Wo, hidden)[:, 0, :, :]
                    acc = acc + rsel * wdw[dy, dx, :]
        acc = jnp.maximum(acc * s2_ref[...] + b2_ref[...], 0.0)

        # ---- 1x1 project conv + BN ---------------------------------------
        y = conv1x1(acc, w2_ref[...], s3_ref, b3_ref)   # (TRo, Wo, Cout)

        # ---- residual + final ReLU ---------------------------------------
        if use_res:
            if s == 1:
                ident = xw[p:p + TRo, p:p + Wo, :]
            else:
                xs = xw[p:p + TRo * s, p:p + Wo * s, :]
                xs = xs.reshape(TRo, s, Wo, s, Cin)[:, 0, :, 0, :]
                wd = wd_ref[...]
                if Cin <= _FMA_MAX_K:
                    ident = xs[:, :, 0:1] * wd[0, :]
                    for c in range(1, Cin):
                        ident = ident + xs[:, :, c:c + 1] * wd[c, :]
                else:
                    ident = jnp.dot(xs.reshape(TRo * Wo, Cin).astype(jnp.bfloat16),
                                    wd.astype(jnp.bfloat16),
                                    preferred_element_type=jnp.float32
                                    ).reshape(TRo, Wo, Cout)
                ident = ident + bd_ref[...]
            y = y + ident
        o_ref[...] = jnp.maximum(y, 0.0)

    return kernel, Ho, Wo, need_dw


def inverted_residual_block(x_nchw, params, *, kernel_size, stride):
    """x_nchw: (N, Cin, H, W) float32.  Returns NCHW."""
    N, Cin, H, W = x_nchw.shape
    hidden = params["w1"].shape[1]
    Cout = params["w2"].shape[1]
    use_res = Cin == Cout
    k, s = kernel_size, stride
    p = k // 2
    if s != 1:
        assert H % s == 0 and W % s == 0, "demo requires spatial dims divisible by stride"

    # NHWC + one-time spatial zero padding at the boundary (no in-kernel concat).
    x = jnp.transpose(x_nchw, (0, 2, 3, 1)).astype(jnp.float32)
    pad_bot = p + (s - 1 if s != 1 else 0)
    xpad = jnp.pad(x, ((0, 0), (p, pad_bot), (p, p), (0, 0)))
    Hp, Wp = xpad.shape[1], xpad.shape[2]

    vmem_cap = _vmem_capacity_bytes()
    Ho_full = (H + 2 * p - k) // s + 1
    TRo = _pick_row_tile(Ho_full, Wp, hidden, s, k, N, vmem_cap // 8)

    kernel, Ho, Wo, need_dw = _make_kernel(H, W, Cin, Cout, hidden, k, s, use_res, TRo)
    R = Ho // TRo

    operands = [xpad,
                params["w1"], params["s1"], params["b1"],
                params["wdw"], params["s2"], params["b2"],
                params["w2"], params["s3"], params["b3"]]
    if need_dw:
        operands += [params["wd"], params["bd"]]

    def full_spec(a):
        nd = a.ndim
        return pl.BlockSpec(a.shape, lambda n, r, _nd=nd: (0,) * _nd)

    in_specs = [pl.BlockSpec((pl.Squeezed(), Hp, Wp, Cin), lambda n, r: (n, 0, 0, 0))]
    in_specs += [full_spec(a) for a in operands[1:]]
    out_spec = pl.BlockSpec((pl.Squeezed(), TRo, Wo, Cout), lambda n, r: (n, r, 0, 0))

    out = pl.pallas_call(
        kernel,
        out_shape=jax.ShapeDtypeStruct((N, Ho, Wo, Cout), jnp.float32),
        grid=(N, R),
        in_specs=in_specs,
        out_specs=out_spec,
        compiler_params=pltpu.CompilerParams(
            dimension_semantics=("parallel", "parallel"),
            vmem_limit_bytes=min(vmem_cap // 2, 96 * 1024 * 1024)),
    )(*operands)

    return jnp.transpose(out, (0, 3, 1, 2))  # back to NCHW


# ----------------------------------------------------------------------------
# Parameter construction (deterministic, synthetic) and pure-JAX reference.
# ----------------------------------------------------------------------------
def make_params(key, in_channels, out_channels, kernel_size, stride,
                expansion_factor=4, eps=1e-5):
    hidden = int(in_channels * expansion_factor)
    ks = jax.random.split(key, 12)

    def bn(kg, kb, km, kv, c):
        gamma = 1.0 + 0.1 * jax.random.normal(kg, (c,), jnp.float32)
        beta = 0.1 * jax.random.normal(kb, (c,), jnp.float32)
        mean = 0.1 * jax.random.normal(km, (c,), jnp.float32)
        var = jnp.abs(jax.random.normal(kv, (c,), jnp.float32)) + 0.5
        scale = gamma / jnp.sqrt(var + eps)
        bias = beta - mean * scale
        return scale, bias

    w1_oihw = 0.2 * jax.random.normal(ks[0], (hidden, in_channels, 1, 1), jnp.float32)
    wdw_oihw = 0.2 * jax.random.normal(ks[1], (hidden, 1, kernel_size, kernel_size), jnp.float32)
    w2_oihw = 0.2 * jax.random.normal(ks[2], (out_channels, hidden, 1, 1), jnp.float32)
    s1, b1 = bn(ks[3], ks[4], ks[5], ks[6], hidden)
    s2, b2 = bn(ks[7], ks[8], ks[9], ks[10], hidden)
    k2 = jax.random.split(ks[11], 6)
    s3, b3 = bn(k2[0], k2[1], k2[2], k2[3], out_channels)

    params = {
        "w1": jnp.transpose(w1_oihw[:, :, 0, 0], (1, 0)),          # (Cin, hidden)
        "s1": s1.reshape(1, hidden), "b1": b1.reshape(1, hidden),
        "wdw": jnp.transpose(wdw_oihw[:, 0], (1, 2, 0)),            # (k, k, hidden)
        "s2": s2.reshape(1, hidden), "b2": b2.reshape(1, hidden),
        "w2": jnp.transpose(w2_oihw[:, :, 0, 0], (1, 0)),           # (hidden, Cout)
        "s3": s3.reshape(1, out_channels), "b3": b3.reshape(1, out_channels),
    }
    oihw = {"w1": w1_oihw, "wdw": wdw_oihw, "w2": w2_oihw}
    if stride != 1:
        wd_oihw = 0.2 * jax.random.normal(k2[4], (out_channels, in_channels, 1, 1), jnp.float32)
        bd = 0.1 * jax.random.normal(k2[5], (out_channels,), jnp.float32)
        params["wd"] = jnp.transpose(wd_oihw[:, :, 0, 0], (1, 0))   # (Cin, Cout)
        params["bd"] = bd.reshape(1, out_channels)
        oihw["wd"], oihw["bd"] = wd_oihw, bd
    return params, oihw, hidden


def reference_nchw(x, params, oihw, *, kernel_size, stride):
    """Independent reference using lax.conv_general_dilated (NCHW)."""
    Cin = x.shape[1]
    hidden = oihw["w1"].shape[0]
    use_res = Cin == oihw["w2"].shape[0]
    p = kernel_size // 2
    dn = ("NCHW", "OIHW", "NCHW")

    def bnc(t, s, b):
        return t * s.reshape(1, -1, 1, 1) + b.reshape(1, -1, 1, 1)

    if stride != 1:
        identity = lax.conv_general_dilated(x, oihw["wd"], (stride, stride),
                                            "VALID", dimension_numbers=dn)
        identity = identity + oihw["bd"].reshape(1, -1, 1, 1)
    else:
        identity = x

    t = lax.conv_general_dilated(x, oihw["w1"], (1, 1), "VALID", dimension_numbers=dn)
    t = jnp.maximum(bnc(t, params["s1"][0], params["b1"][0]), 0.0)
    t = lax.conv_general_dilated(t, oihw["wdw"], (stride, stride),
                                 [(p, p), (p, p)], dimension_numbers=dn,
                                 feature_group_count=hidden)
    t = jnp.maximum(bnc(t, params["s2"][0], params["b2"][0]), 0.0)
    t = lax.conv_general_dilated(t, oihw["w2"], (1, 1), "VALID", dimension_numbers=dn)
    t = bnc(t, params["s3"][0], params["b3"][0])
    if use_res:
        t = t + identity
    return jnp.maximum(t, 0.0)


if __name__ == "__main__":
    N, Cin, H, W = 2, 4, 16, 16
    Cout, kernel_size, stride, expansion = 4, 3, 1, 4

    key = jax.random.PRNGKey(0)
    kx, kp = jax.random.split(key)
    x = jax.random.normal(kx, (N, Cin, H, W), jnp.float32)   # PyTorch NCHW input

    params, oihw, hidden = make_params(kp, Cin, Cout, kernel_size, stride, expansion)

    out = inverted_residual_block(x, params, kernel_size=kernel_size, stride=stride)
    out = jax.block_until_ready(out)

    ref = reference_nchw(x, params, oihw, kernel_size=kernel_size, stride=stride)
    assert out.shape == ref.shape, (out.shape, ref.shape)
    assert jnp.allclose(out, ref, atol=1e-4, rtol=1e-4), float(jnp.max(jnp.abs(out - ref)))

    print("KERNEL_OK")
</pallas_src>

<mosaic_0001>
module attributes {stable_mosaic.version = 11 : i64} {
  func.func @kernel(%arg0: i32, %arg1: i32, %arg2: memref<1x18x18x4xf32, #tpu.memory_space<vmem>>, %arg3: memref<4x16xf32, #tpu.memory_space<vmem>>, %arg4: memref<1x16xf32, #tpu.memory_space<vmem>>, %arg5: memref<1x16xf32, #tpu.memory_space<vmem>>, %arg6: memref<3x3x16xf32, #tpu.memory_space<vmem>>, %arg7: memref<1x16xf32, #tpu.memory_space<vmem>>, %arg8: memref<1x16xf32, #tpu.memory_space<vmem>>, %arg9: memref<16x4xf32, #tpu.memory_space<vmem>>, %arg10: memref<1x4xf32, #tpu.memory_space<vmem>>, %arg11: memref<1x4xf32, #tpu.memory_space<vmem>>, %arg12: memref<1x4x16x4xf32, #tpu.memory_space<vmem>>) attributes {dimension_semantics = [#tpu.dimension_semantics<parallel>, #tpu.dimension_semantics<parallel>], iteration_bounds = array<i64: 2, 4>, scalar_prefetch = 0 : i64, scratch_operands = 0 : i64, tpu.core_type = #tpu.core_type<tc>, window_params = [{transform_indices = @transform_0, window_bounds = array<i64: 1, 18, 18, 4>}, {pipeline_mode = #tpu.pipeline_mode<synchronous>, transform_indices = @transform_1, window_bounds = array<i64: 4, 16>}, {pipeline_mode = #tpu.pipeline_mode<synchronous>, transform_indices = @transform_2, window_bounds = array<i64: 1, 16>}, {pipeline_mode = #tpu.pipeline_mode<synchronous>, transform_indices = @transform_3, window_bounds = array<i64: 1, 16>}, {pipeline_mode = #tpu.pipeline_mode<synchronous>, transform_indices = @transform_4, window_bounds = array<i64: 3, 3, 16>}, {pipeline_mode = #tpu.pipeline_mode<synchronous>, transform_indices = @transform_5, window_bounds = array<i64: 1, 16>}, {pipeline_mode = #tpu.pipeline_mode<synchronous>, transform_indices = @transform_6, window_bounds = array<i64: 1, 16>}, {pipeline_mode = #tpu.pipeline_mode<synchronous>, transform_indices = @transform_7, window_bounds = array<i64: 16, 4>}, {pipeline_mode = #tpu.pipeline_mode<synchronous>, transform_indices = @transform_8, window_bounds = array<i64: 1, 4>}, {pipeline_mode = #tpu.pipeline_mode<synchronous>, transform_indices = @transform_9, window_bounds = array<i64: 1, 4>}, {transform_indices = @transform_10, window_bounds = array<i64: 1, 4, 16, 4>}]} {
    %c4_i32 = arith.constant 4 : i32
    %0 = arith.muli %arg1, %c4_i32 : i32
    %c0 = arith.constant 0 : index
    %1 = arith.index_cast %0 : i32 to index
    %c0_0 = arith.constant 0 : index
    %c0_1 = arith.constant 0 : index
    %2 = vector.load %arg2[%c0, %1, %c0_0, %c0_1] : memref<1x18x18x4xf32, #tpu.memory_space<vmem>>, vector<1x6x18x4xf32>
    %3 = vector.shape_cast %2 : vector<1x6x18x4xf32> to vector<6x18x4xf32>
    %c0_2 = arith.constant 0 : index
    %c0_3 = arith.constant 0 : index
    %4 = vector.load %arg3[%c0_2, %c0_3] : memref<4x16xf32, #tpu.memory_space<vmem>>, vector<4x16xf32>
    %5 = vector.extract_strided_slice %3 {offsets = [0, 0, 0], sizes = [6, 18, 1], strides = [1, 1, 1]} : vector<6x18x4xf32> to vector<6x18x1xf32>
    %6 = vector.extract_strided_slice %4 {offsets = [0, 0], sizes = [1, 16], strides = [1, 1]} : vector<4x16xf32> to vector<1x16xf32>
    %7 = vector.shape_cast %6 : vector<1x16xf32> to vector<16xf32>
    %8 = vector.shape_cast %7 : vector<16xf32> to vector<1x1x16xf32>
    %9 = vector.broadcast %5 : vector<6x18x1xf32> to vector<6x18x16xf32>
    %10 = vector.broadcast %8 : vector<1x1x16xf32> to vector<6x18x16xf32>
    %11 = arith.mulf %9, %10 : vector<6x18x16xf32>
    %12 = vector.extract_strided_slice %3 {offsets = [0, 0, 1], sizes = [6, 18, 1], strides = [1, 1, 1]} : vector<6x18x4xf32> to vector<6x18x1xf32>
    %13 = vector.extract_strided_slice %4 {offsets = [1, 0], sizes = [1, 16], strides = [1, 1]} : vector<4x16xf32> to vector<1x16xf32>
    %14 = vector.shape_cast %13 : vector<1x16xf32> to vector<16xf32>
    %15 = vector.shape_cast %14 : vector<16xf32> to vector<1x1x16xf32>
    %16 = vector.broadcast %12 : vector<6x18x1xf32> to vector<6x18x16xf32>
    %17 = vector.broadcast %15 : vector<1x1x16xf32> to vector<6x18x16xf32>
    %18 = arith.mulf %16, %17 : vector<6x18x16xf32>
    %19 = arith.addf %11, %18 : vector<6x18x16xf32>
    %20 = vector.extract_strided_slice %3 {offsets = [0, 0, 2], sizes = [6, 18, 1], strides = [1, 1, 1]} : vector<6x18x4xf32> to vector<6x18x1xf32>
    %21 = vector.extract_strided_slice %4 {offsets = [2, 0], sizes = [1, 16], strides = [1, 1]} : vector<4x16xf32> to vector<1x16xf32>
    %22 = vector.shape_cast %21 : vector<1x16xf32> to vector<16xf32>
    %23 = vector.shape_cast %22 : vector<16xf32> to vector<1x1x16xf32>
    %24 = vector.broadcast %20 : vector<6x18x1xf32> to vector<6x18x16xf32>
    %25 = vector.broadcast %23 : vector<1x1x16xf32> to vector<6x18x16xf32>
    %26 = arith.mulf %24, %25 : vector<6x18x16xf32>
    %27 = arith.addf %19, %26 : vector<6x18x16xf32>
    %28 = vector.extract_strided_slice %3 {offsets = [0, 0, 3], sizes = [6, 18, 1], strides = [1, 1, 1]} : vector<6x18x4xf32> to vector<6x18x1xf32>
    %29 = vector.extract_strided_slice %4 {offsets = [3, 0], sizes = [1, 16], strides = [1, 1]} : vector<4x16xf32> to vector<1x16xf32>
    %30 = vector.shape_cast %29 : vector<1x16xf32> to vector<16xf32>
    %31 = vector.shape_cast %30 : vector<16xf32> to vector<1x1x16xf32>
    %32 = vector.broadcast %28 : vector<6x18x1xf32> to vector<6x18x16xf32>
    %33 = vector.broadcast %31 : vector<1x1x16xf32> to vector<6x18x16xf32>
    %34 = arith.mulf %32, %33 : vector<6x18x16xf32>
    %35 = arith.addf %27, %34 : vector<6x18x16xf32>
    %c0_4 = arith.constant 0 : index
    %c0_5 = arith.constant 0 : index
    %36 = vector.load %arg4[%c0_4, %c0_5] : memref<1x16xf32, #tpu.memory_space<vmem>>, vector<1x16xf32>
    %37 = vector.shape_cast %36 : vector<1x16xf32> to vector<1x1x16xf32>
    %38 = vector.broadcast %37 : vector<1x1x16xf32> to vector<6x18x16xf32>
    %39 = arith.mulf %35, %38 : vector<6x18x16xf32>
    %c0_6 = arith.constant 0 : index
    %c0_7 = arith.constant 0 : index
    %40 = vector.load %arg5[%c0_6, %c0_7] : memref<1x16xf32, #tpu.memory_space<vmem>>, vector<1x16xf32>
    %41 = vector.shape_cast %40 : vector<1x16xf32> to vector<1x1x16xf32>
    %42 = vector.broadcast %41 : vector<1x1x16xf32> to vector<6x18x16xf32>
    %43 = arith.addf %39, %42 : vector<6x18x16xf32>
    %cst = arith.constant 0.000000e+00 : f32
    %44 = vector.broadcast %cst : f32 to vector<6x18x16xf32>
    %45 = arith.maximumf %43, %44 : vector<6x18x16xf32>
    %46 = tpu.iota {dimensions = array<i32: 0>} : vector<6x18x16xi32>
    %47 = vector.broadcast %0 : i32 to vector<6x18x16xi32>
    %48 = arith.addi %46, %47 : vector<6x18x16xi32>
    %49 = tpu.iota {dimensions = array<i32: 1>} : vector<6x18x16xi32>
    %c1_i32 = arith.constant 1 : i32
    %50 = vector.broadcast %c1_i32 : i32 to vector<6x18x16xi32>
    %51 = arith.cmpi sge, %48, %50 : vector<6x18x16xi32>
    %c17_i32 = arith.constant 17 : i32
    %52 = vector.broadcast %c17_i32 : i32 to vector<6x18x16xi32>
    %53 = arith.cmpi slt, %48, %52 : vector<6x18x16xi32>
    %54 = arith.andi %51, %53 : vector<6x18x16xi1>
    %c1_i32_8 = arith.constant 1 : i32
    %55 = vector.broadcast %c1_i32_8 : i32 to vector<6x18x16xi32>
    %56 = arith.cmpi sge, %49, %55 : vector<6x18x16xi32>
    %57 = arith.andi %54, %56 : vector<6x18x16xi1>
    %c17_i32_9 = arith.constant 17 : i32
    %58 = vector.broadcast %c17_i32_9 : i32 to vector<6x18x16xi32>
    %59 = arith.cmpi slt, %49, %58 : vector<6x18x16xi32>
    %60 = arith.andi %57, %59 : vector<6x18x16xi1>
    %cst_10 = arith.constant 0.000000e+00 : f32
    %61 = vector.broadcast %cst_10 : f32 to vector<6x18x16xf32>
    %62 = arith.select %60, %45, %61 : vector<6x18x16xi1>, vector<6x18x16xf32>
    %c0_11 = arith.constant 0 : index
    %c0_12 = arith.constant 0 : index
    %c0_13 = arith.constant 0 : index
    %63 = vector.load %arg6[%c0_11, %c0_12, %c0_13] : memref<3x3x16xf32, #tpu.memory_space<vmem>>, vector<3x3x16xf32>
    %cst_14 = arith.constant 0.000000e+00 : f32
    %64 = vector.broadcast %cst_14 : f32 to vector<4x16x16xf32>
    %65 = vector.extract_strided_slice %62 {offsets = [0, 0, 0], sizes = [6, 16, 16], strides = [1, 1, 1]} : vector<6x18x16xf32> to vector<6x16x16xf32>
    %66 = vector.extract_strided_slice %65 {offsets = [0, 0, 0], sizes = [4, 16, 16], strides = [1, 1, 1]} : vector<6x16x16xf32> to vector<4x16x16xf32>
    %67 = vector.extract_strided_slice %63 {offsets = [0, 0, 0], sizes = [1, 1, 16], strides = [1, 1, 1]} : vector<3x3x16xf32> to vector<1x1x16xf32>
    %68 = vector.shape_cast %67 : vector<1x1x16xf32> to vector<16xf32>
    %69 = vector.shape_cast %68 : vector<16xf32> to vector<1x1x16xf32>
    %70 = vector.broadcast %69 : vector<1x1x16xf32> to vector<4x16x16xf32>
    %71 = arith.mulf %66, %70 : vector<4x16x16xf32>
    %72 = arith.addf %64, %71 : vector<4x16x16xf32>
    %73 = vector.extract_strided_slice %65 {offsets = [1, 0, 0], sizes = [4, 16, 16], strides = [1, 1, 1]} : vector<6x16x16xf32> to vector<4x16x16xf32>
    %74 = vector.extract_strided_slice %63 {offsets = [1, 0, 0], sizes = [1, 1, 16], strides = [1, 1, 1]} : vector<3x3x16xf32> to vector<1x1x16xf32>
    %75 = vector.shape_cast %74 : vector<1x1x16xf32> to vector<16xf32>
    %76 = vector.shape_cast %75 : vector<16xf32> to vector<1x1x16xf32>
    %77 = vector.broadcast %76 : vector<1x1x16xf32> to vector<4x16x16xf32>
    %78 = arith.mulf %73, %77 : vector<4x16x16xf32>
    %79 = arith.addf %72, %78 : vector<4x16x16xf32>
    %80 = vector.extract_strided_slice %65 {offsets = [2, 0, 0], sizes = [4, 16, 16], strides = [1, 1, 1]} : vector<6x16x16xf32> to vector<4x16x16xf32>
    %81 = vector.extract_strided_slice %63 {offsets = [2, 0, 0], sizes = [1, 1, 16], strides = [1, 1, 1]} : vector<3x3x16xf32> to vector<1x1x16xf32>
    %82 = vector.shape_cast %81 : vector<1x1x16xf32> to vector<16xf32>
    %83 = vector.shape_cast %82 : vector<16xf32> to vector<1x1x16xf32>
    %84 = vector.broadcast %83 : vector<1x1x16xf32> to vector<4x16x16xf32>
    %85 = arith.mulf %80, %84 : vector<4x16x16xf32>
    %86 = arith.addf %79, %85 : vector<4x16x16xf32>
    %87 = vector.extract_strided_slice %62 {offsets = [0, 1, 0], sizes = [6, 16, 16], strides = [1, 1, 1]} : vector<6x18x16xf32> to vector<6x16x16xf32>
    %88 = vector.extract_strided_slice %87 {offsets = [0, 0, 0], sizes = [4, 16, 16], strides = [1, 1, 1]} : vector<6x16x16xf32> to vector<4x16x16xf32>
    %89 = vector.extract_strided_slice %63 {offsets = [0, 1, 0], sizes = [1, 1, 16], strides = [1, 1, 1]} : vector<3x3x16xf32> to vector<1x1x16xf32>
    %90 = vector.shape_cast %89 : vector<1x1x16xf32> to vector<16xf32>
    %91 = vector.shape_cast %90 : vector<16xf32> to vector<1x1x16xf32>
    %92 = vector.broadcast %91 : vector<1x1x16xf32> to vector<4x16x16xf32>
    %93 = arith.mulf %88, %92 : vector<4x16x16xf32>
    %94 = arith.addf %86, %93 : vector<4x16x16xf32>
    %95 = vector.extract_strided_slice %87 {offsets = [1, 0, 0], sizes = [4, 16, 16], strides = [1, 1, 1]} : vector<6x16x16xf32> to vector<4x16x16xf32>
    %96 = vector.extract_strided_slice %63 {offsets = [1, 1, 0], sizes = [1, 1, 16], strides = [1, 1, 1]} : vector<3x3x16xf32> to vector<1x1x16xf32>
    %97 = vector.shape_cast %96 : vector<1x1x16xf32> to vector<16xf32>
    %98 = vector.shape_cast %97 : vector<16xf32> to vector<1x1x16xf32>
    %99 = vector.broadcast %98 : vector<1x1x16xf32> to vector<4x16x16xf32>
    %100 = arith.mulf %95, %99 : vector<4x16x16xf32>
    %101 = arith.addf %94, %100 : vector<4x16x16xf32>
    %102 = vector.extract_strided_slice %87 {offsets = [2, 0, 0], sizes = [4, 16, 16], strides = [1, 1, 1]} : vector<6x16x16xf32> to vector<4x16x16xf32>
    %103 = vector.extract_strided_slice %63 {offsets = [2, 1, 0], sizes = [1, 1, 16], strides = [1, 1, 1]} : vector<3x3x16xf32> to vector<1x1x16xf32>
    %104 = vector.shape_cast %103 : vector<1x1x16xf32> to vector<16xf32>
    %105 = vector.shape_cast %104 : vector<16xf32> to vector<1x1x16xf32>
    %106 = vector.broadcast %105 : vector<1x1x16xf32> to vector<4x16x16xf32>
    %107 = arith.mulf %102, %106 : vector<4x16x16xf32>
    %108 = arith.addf %101, %107 : vector<4x16x16xf32>
    %109 = vector.extract_strided_slice %62 {offsets = [0, 2, 0], sizes = [6, 16, 16], strides = [1, 1, 1]} : vector<6x18x16xf32> to vector<6x16x16xf32>
    %110 = vector.extract_strided_slice %109 {offsets = [0, 0, 0], sizes = [4, 16, 16], strides = [1, 1, 1]} : vector<6x16x16xf32> to vector<4x16x16xf32>
    %111 = vector.extract_strided_slice %63 {offsets = [0, 2, 0], sizes = [1, 1, 16], strides = [1, 1, 1]} : vector<3x3x16xf32> to vector<1x1x16xf32>
    %112 = vector.shape_cast %111 : vector<1x1x16xf32> to vector<16xf32>
    %113 = vector.shape_cast %112 : vector<16xf32> to vector<1x1x16xf32>
    %114 = vector.broadcast %113 : vector<1x1x16xf32> to vector<4x16x16xf32>
    %115 = arith.mulf %110, %114 : vector<4x16x16xf32>
    %116 = arith.addf %108, %115 : vector<4x16x16xf32>
    %117 = vector.extract_strided_slice %109 {offsets = [1, 0, 0], sizes = [4, 16, 16], strides = [1, 1, 1]} : vector<6x16x16xf32> to vector<4x16x16xf32>
    %118 = vector.extract_strided_slice %63 {offsets = [1, 2, 0], sizes = [1, 1, 16], strides = [1, 1, 1]} : vector<3x3x16xf32> to vector<1x1x16xf32>
    %119 = vector.shape_cast %118 : vector<1x1x16xf32> to vector<16xf32>
    %120 = vector.shape_cast %119 : vector<16xf32> to vector<1x1x16xf32>
    %121 = vector.broadcast %120 : vector<1x1x16xf32> to vector<4x16x16xf32>
    %122 = arith.mulf %117, %121 : vector<4x16x16xf32>
    %123 = arith.addf %116, %122 : vector<4x16x16xf32>
    %124 = vector.extract_strided_slice %109 {offsets = [2, 0, 0], sizes = [4, 16, 16], strides = [1, 1, 1]} : vector<6x16x16xf32> to vector<4x16x16xf32>
    %125 = vector.extract_strided_slice %63 {offsets = [2, 2, 0], sizes = [1, 1, 16], strides = [1, 1, 1]} : vector<3x3x16xf32> to vector<1x1x16xf32>
    %126 = vector.shape_cast %125 : vector<1x1x16xf32> to vector<16xf32>
    %127 = vector.shape_cast %126 : vector<16xf32> to vector<1x1x16xf32>
    %128 = vector.broadcast %127 : vector<1x1x16xf32> to vector<4x16x16xf32>
    %129 = arith.mulf %124, %128 : vector<4x16x16xf32>
    %130 = arith.addf %123, %129 : vector<4x16x16xf32>
    %c0_15 = arith.constant 0 : index
    %c0_16 = arith.constant 0 : index
    %131 = vector.load %arg7[%c0_15, %c0_16] : memref<1x16xf32, #tpu.memory_space<vmem>>, vector<1x16xf32>
    %132 = vector.shape_cast %131 : vector<1x16xf32> to vector<1x1x16xf32>
    %133 = vector.broadcast %132 : vector<1x1x16xf32> to vector<4x16x16xf32>
    %134 = arith.mulf %130, %133 : vector<4x16x16xf32>
    %c0_17 = arith.constant 0 : index
    %c0_18 = arith.constant 0 : index
    %135 = vector.load %arg8[%c0_17, %c0_18] : memref<1x16xf32, #tpu.memory_space<vmem>>, vector<1x16xf32>
    %136 = vector.shape_cast %135 : vector<1x16xf32> to vector<1x1x16xf32>
    %137 = vector.broadcast %136 : vector<1x1x16xf32> to vector<4x16x16xf32>
    %138 = arith.addf %134, %137 : vector<4x16x16xf32>
    %cst_19 = arith.constant 0.000000e+00 : f32
    %139 = vector.broadcast %cst_19 : f32 to vector<4x16x16xf32>
    %140 = arith.maximumf %138, %139 : vector<4x16x16xf32>
    %c0_20 = arith.constant 0 : index
    %c0_21 = arith.constant 0 : index
    %141 = vector.load %arg9[%c0_20, %c0_21] : memref<16x4xf32, #tpu.memory_space<vmem>>, vector<16x4xf32>
    %142 = vector.extract_strided_slice %140 {offsets = [0, 0, 0], sizes = [4, 16, 1], strides = [1, 1, 1]} : vector<4x16x16xf32> to vector<4x16x1xf32>
    %143 = vector.extract_strided_slice %141 {offsets = [0, 0], sizes = [1, 4], strides = [1, 1]} : vector<16x4xf32> to vector<1x4xf32>
    %144 = vector.shape_cast %143 : vector<1x4xf32> to vector<4xf32>
    %145 = vector.shape_cast %144 : vector<4xf32> to vector<1x1x4xf32>
    %146 = vector.broadcast %142 : vector<4x16x1xf32> to vector<4x16x4xf32>
    %147 = vector.broadcast %145 : vector<1x1x4xf32> to vector<4x16x4xf32>
    %148 = arith.mulf %146, %147 : vector<4x16x4xf32>
    %149 = vector.extract_strided_slice %140 {offsets = [0, 0, 1], sizes = [4, 16, 1], strides = [1, 1, 1]} : vector<4x16x16xf32> to vector<4x16x1xf32>
    %150 = vector.extract_strided_slice %141 {offsets = [1, 0], sizes = [1, 4], strides = [1, 1]} : vector<16x4xf32> to vector<1x4xf32>
    %151 = vector.shape_cast %150 : vector<1x4xf32> to vector<4xf32>
    %152 = vector.shape_cast %151 : vector<4xf32> to vector<1x1x4xf32>
    %153 = vector.broadcast %149 : vector<4x16x1xf32> to vector<4x16x4xf32>
    %154 = vector.broadcast %152 : vector<1x1x4xf32> to vector<4x16x4xf32>
    %155 = arith.mulf %153, %154 : vector<4x16x4xf32>
    %156 = arith.addf %148, %155 : vector<4x16x4xf32>
    %157 = vector.extract_strided_slice %140 {offsets = [0, 0, 2], sizes = [4, 16, 1], strides = [1, 1, 1]} : vector<4x16x16xf32> to vector<4x16x1xf32>
    %158 = vector.extract_strided_slice %141 {offsets = [2, 0], sizes = [1, 4], strides = [1, 1]} : vector<16x4xf32> to vector<1x4xf32>
    %159 = vector.shape_cast %158 : vector<1x4xf32> to vector<4xf32>
    %160 = vector.shape_cast %159 : vector<4xf32> to vector<1x1x4xf32>
    %161 = vector.broadcast %157 : vector<4x16x1xf32> to vector<4x16x4xf32>
    %162 = vector.broadcast %160 : vector<1x1x4xf32> to vector<4x16x4xf32>
    %163 = arith.mulf %161, %162 : vector<4x16x4xf32>
    %164 = arith.addf %156, %163 : vector<4x16x4xf32>
    %165 = vector.extract_strided_slice %140 {offsets = [0, 0, 3], sizes = [4, 16, 1], strides = [1, 1, 1]} : vector<4x16x16xf32> to vector<4x16x1xf32>
    %166 = vector.extract_strided_slice %141 {offsets = [3, 0], sizes = [1, 4], strides = [1, 1]} : vector<16x4xf32> to vector<1x4xf32>
    %167 = vector.shape_cast %166 : vector<1x4xf32> to vector<4xf32>
    %168 = vector.shape_cast %167 : vector<4xf32> to vector<1x1x4xf32>
    %169 = vector.broadcast %165 : vector<4x16x1xf32> to vector<4x16x4xf32>
    %170 = vector.broadcast %168 : vector<1x1x4xf32> to vector<4x16x4xf32>
    %171 = arith.mulf %169, %170 : vector<4x16x4xf32>
    %172 = arith.addf %164, %171 : vector<4x16x4xf32>
    %173 = vector.extract_strided_slice %140 {offsets = [0, 0, 4], sizes = [4, 16, 1], strides = [1, 1, 1]} : vector<4x16x16xf32> to vector<4x16x1xf32>
    %174 = vector.extract_strided_slice %141 {offsets = [4, 0], sizes = [1, 4], strides = [1, 1]} : vector<16x4xf32> to vector<1x4xf32>
    %175 = vector.shape_cast %174 : vector<1x4xf32> to vector<4xf32>
    %176 = vector.shape_cast %175 : vector<4xf32> to vector<1x1x4xf32>
    %177 = vector.broadcast %173 : vector<4x16x1xf32> to vector<4x16x4xf32>
    %178 = vector.broadcast %176 : vector<1x1x4xf32> to vector<4x16x4xf32>
    %179 = arith.mulf %177, %178 : vector<4x16x4xf32>
    %180 = arith.addf %172, %179 : vector<4x16x4xf32>
    %181 = vector.extract_strided_slice %140 {offsets = [0, 0, 5], sizes = [4, 16, 1], strides = [1, 1, 1]} : vector<4x16x16xf32> to vector<4x16x1xf32>
    %182 = vector.extract_strided_slice %141 {offsets = [5, 0], sizes = [1, 4], strides = [1, 1]} : vector<16x4xf32> to vector<1x4xf32>
    %183 = vector.shape_cast %182 : vector<1x4xf32> to vector<4xf32>
    %184 = vector.shape_cast %183 : vector<4xf32> to vector<1x1x4xf32>
    %185 = vector.broadcast %181 : vector<4x16x1xf32> to vector<4x16x4xf32>
    %186 = vector.broadcast %184 : vector<1x1x4xf32> to vector<4x16x4xf32>
    %187 = arith.mulf %185, %186 : vector<4x16x4xf32>
    %188 = arith.addf %180, %187 : vector<4x16x4xf32>
    %189 = vector.extract_strided_slice %140 {offsets = [0, 0, 6], sizes = [4, 16, 1], strides = [1, 1, 1]} : vector<4x16x16xf32> to vector<4x16x1xf32>
    %190 = vector.extract_strided_slice %141 {offsets = [6, 0], sizes = [1, 4], strides = [1, 1]} : vector<16x4xf32> to vector<1x4xf32>
    %191 = vector.shape_cast %190 : vector<1x4xf32> to vector<4xf32>
    %192 = vector.shape_cast %191 : vector<4xf32> to vector<1x1x4xf32>
    %193 = vector.broadcast %189 : vector<4x16x1xf32> to vector<4x16x4xf32>
    %194 = vector.broadcast %192 : vector<1x1x4xf32> to vector<4x16x4xf32>
    %195 = arith.mulf %193, %194 : vector<4x16x4xf32>
    %196 = arith.addf %188, %195 : vector<4x16x4xf32>
    %197 = vector.extract_strided_slice %140 {offsets = [0, 0, 7], sizes = [4, 16, 1], strides = [1, 1, 1]} : vector<4x16x16xf32> to vector<4x16x1xf32>
    %198 = vector.extract_strided_slice %141 {offsets = [7, 0], sizes = [1, 4], strides = [1, 1]} : vector<16x4xf32> to vector<1x4xf32>
    %199 = vector.shape_cast %198 : vector<1x4xf32> to vector<4xf32>
    %200 = vector.shape_cast %199 : vector<4xf32> to vector<1x1x4xf32>
    %201 = vector.broadcast %197 : vector<4x16x1xf32> to vector<4x16x4xf32>
    %202 = vector.broadcast %200 : vector<1x1x4xf32> to vector<4x16x4xf32>
    %203 = arith.mulf %201, %202 : vector<4x16x4xf32>
    %204 = arith.addf %196, %203 : vector<4x16x4xf32>
    %205 = vector.extract_strided_slice %140 {offsets = [0, 0, 8], sizes = [4, 16, 1], strides = [1, 1, 1]} : vector<4x16x16xf32> to vector<4x16x1xf32>
    %206 = vector.extract_strided_slice %141 {offsets = [8, 0], sizes = [1, 4], strides = [1, 1]} : vector<16x4xf32> to vector<1x4xf32>
    %207 = vector.shape_cast %206 : vector<1x4xf32> to vector<4xf32>
    %208 = vector.shape_cast %207 : vector<4xf32> to vector<1x1x4xf32>
    %209 = vector.broadcast %205 : vector<4x16x1xf32> to vector<4x16x4xf32>
    %210 = vector.broadcast %208 : vector<1x1x4xf32> to vector<4x16x4xf32>
    %211 = arith.mulf %209, %210 : vector<4x16x4xf32>
    %212 = arith.addf %204, %211 : vector<4x16x4xf32>
    %213 = vector.extract_strided_slice %140 {offsets = [0, 0, 9], sizes = [4, 16, 1], strides = [1, 1, 1]} : vector<4x16x16xf32> to vector<4x16x1xf32>
    %214 = vector.extract_strided_slice %141 {offsets = [9, 0], sizes = [1, 4], strides = [1, 1]} : vector<16x4xf32> to vector<1x4xf32>
    %215 = vector.shape_cast %214 : vector<1x4xf32> to vector<4xf32>
    %216 = vector.shape_cast %215 : vector<4xf32> to vector<1x1x4xf32>
    %217 = vector.broadcast %213 : vector<4x16x1xf32> to vector<4x16x4xf32>
    %218 = vector.broadcast %216 : vector<1x1x4xf32> to vector<4x16x4xf32>
    %219 = arith.mulf %217, %218 : vector<4x16x4xf32>
    %220 = arith.addf %212, %219 : vector<4x16x4xf32>
    %221 = vector.extract_strided_slice %140 {offsets = [0, 0, 10], sizes = [4, 16, 1], strides = [1, 1, 1]} : vector<4x16x16xf32> to vector<4x16x1xf32>
    %222 = vector.extract_strided_slice %141 {offsets = [10, 0], sizes = [1, 4], strides = [1, 1]} : vector<16x4xf32> to vector<1x4xf32>
    %223 = vector.shape_cast %222 : vector<1x4xf32> to vector<4xf32>
    %224 = vector.shape_cast %223 : vector<4xf32> to vector<1x1x4xf32>
    %225 = vector.broadcast %221 : vector<4x16x1xf32> to vector<4x16x4xf32>
    %226 = vector.broadcast %224 : vector<1x1x4xf32> to vector<4x16x4xf32>
    %227 = arith.mulf %225, %226 : vector<4x16x4xf32>
    %228 = arith.addf %220, %227 : vector<4x16x4xf32>
    %229 = vector.extract_strided_slice %140 {offsets = [0, 0, 11], sizes = [4, 16, 1], strides = [1, 1, 1]} : vector<4x16x16xf32> to vector<4x16x1xf32>
    %230 = vector.extract_strided_slice %141 {offsets = [11, 0], sizes = [1, 4], strides = [1, 1]} : vector<16x4xf32> to vector<1x4xf32>
    %231 = vector.shape_cast %230 : vector<1x4xf32> to vector<4xf32>
    %232 = vector.shape_cast %231 : vector<4xf32> to vector<1x1x4xf32>
    %233 = vector.broadcast %229 : vector<4x16x1xf32> to vector<4x16x4xf32>
    %234 = vector.broadcast %232 : vector<1x1x4xf32> to vector<4x16x4xf32>
    %235 = arith.mulf %233, %234 : vector<4x16x4xf32>
    %236 = arith.addf %228, %235 : vector<4x16x4xf32>
    %237 = vector.extract_strided_slice %140 {offsets = [0, 0, 12], sizes = [4, 16, 1], strides = [1, 1, 1]} : vector<4x16x16xf32> to vector<4x16x1xf32>
    %238 = vector.extract_strided_slice %141 {offsets = [12, 0], sizes = [1, 4], strides = [1, 1]} : vector<16x4xf32> to vector<1x4xf32>
    %239 = vector.shape_cast %238 : vector<1x4xf32> to vector<4xf32>
    %240 = vector.shape_cast %239 : vector<4xf32> to vector<1x1x4xf32>
    %241 = vector.broadcast %237 : vector<4x16x1xf32> to vector<4x16x4xf32>
    %242 = vector.broadcast %240 : vector<1x1x4xf32> to vector<4x16x4xf32>
    %243 = arith.mulf %241, %242 : vector<4x16x4xf32>
    %244 = arith.addf %236, %243 : vector<4x16x4xf32>
    %245 = vector.extract_strided_slice %140 {offsets = [0, 0, 13], sizes = [4, 16, 1], strides = [1, 1, 1]} : vector<4x16x16xf32> to vector<4x16x1xf32>
    %246 = vector.extract_strided_slice %141 {offsets = [13, 0], sizes = [1, 4], strides = [1, 1]} : vector<16x4xf32> to vector<1x4xf32>
    %247 = vector.shape_cast %246 : vector<1x4xf32> to vector<4xf32>
    %248 = vector.shape_cast %247 : vector<4xf32> to vector<1x1x4xf32>
    %249 = vector.broadcast %245 : vector<4x16x1xf32> to vector<4x16x4xf32>
    %250 = vector.broadcast %248 : vector<1x1x4xf32> to vector<4x16x4xf32>
    %251 = arith.mulf %249, %250 : vector<4x16x4xf32>
    %252 = arith.addf %244, %251 : vector<4x16x4xf32>
    %253 = vector.extract_strided_slice %140 {offsets = [0, 0, 14], sizes = [4, 16, 1], strides = [1, 1, 1]} : vector<4x16x16xf32> to vector<4x16x1xf32>
    %254 = vector.extract_strided_slice %141 {offsets = [14, 0], sizes = [1, 4], strides = [1, 1]} : vector<16x4xf32> to vector<1x4xf32>
    %255 = vector.shape_cast %254 : vector<1x4xf32> to vector<4xf32>
    %256 = vector.shape_cast %255 : vector<4xf32> to vector<1x1x4xf32>
    %257 = vector.broadcast %253 : vector<4x16x1xf32> to vector<4x16x4xf32>
    %258 = vector.broadcast %256 : vector<1x1x4xf32> to vector<4x16x4xf32>
    %259 = arith.mulf %257, %258 : vector<4x16x4xf32>
    %260 = arith.addf %252, %259 : vector<4x16x4xf32>
    %261 = vector.extract_strided_slice %140 {offsets = [0, 0, 15], sizes = [4, 16, 1], strides = [1, 1, 1]} : vector<4x16x16xf32> to vector<4x16x1xf32>
    %262 = vector.extract_strided_slice %141 {offsets = [15, 0], sizes = [1, 4], strides = [1, 1]} : vector<16x4xf32> to vector<1x4xf32>
    %263 = vector.shape_cast %262 : vector<1x4xf32> to vector<4xf32>
    %264 = vector.shape_cast %263 : vector<4xf32> to vector<1x1x4xf32>
    %265 = vector.broadcast %261 : vector<4x16x1xf32> to vector<4x16x4xf32>
    %266 = vector.broadcast %264 : vector<1x1x4xf32> to vector<4x16x4xf32>
    %267 = arith.mulf %265, %266 : vector<4x16x4xf32>
    %268 = arith.addf %260, %267 : vector<4x16x4xf32>
    %c0_22 = arith.constant 0 : index
    %c0_23 = arith.constant 0 : index
    %269 = vector.load %arg10[%c0_22, %c0_23] : memref<1x4xf32, #tpu.memory_space<vmem>>, vector<1x4xf32>
    %270 = vector.shape_cast %269 : vector<1x4xf32> to vector<1x1x4xf32>
    %271 = vector.broadcast %270 : vector<1x1x4xf32> to vector<4x16x4xf32>
    %272 = arith.mulf %268, %271 : vector<4x16x4xf32>
    %c0_24 = arith.constant 0 : index
    %c0_25 = arith.constant 0 : index
    %273 = vector.load %arg11[%c0_24, %c0_25] : memref<1x4xf32, #tpu.memory_space<vmem>>, vector<1x4xf32>
    %274 = vector.shape_cast %273 : vector<1x4xf32> to vector<1x1x4xf32>
    %275 = vector.broadcast %274 : vector<1x1x4xf32> to vector<4x16x4xf32>
    %276 = arith.addf %272, %275 : vector<4x16x4xf32>
    %277 = vector.extract_strided_slice %3 {offsets = [1, 1, 0], sizes = [4, 16, 4], strides = [1, 1, 1]} : vector<6x18x4xf32> to vector<4x16x4xf32>
    %278 = arith.addf %276, %277 : vector<4x16x4xf32>
    %cst_26 = arith.constant 0.000000e+00 : f32
    %279 = vector.broadcast %cst_26 : f32 to vector<4x16x4xf32>
    %280 = arith.maximumf %278, %279 : vector<4x16x4xf32>
    %c0_27 = arith.constant 0 : index
    %c0_28 = arith.constant 0 : index
    %c0_29 = arith.constant 0 : index
    %c0_30 = arith.constant 0 : index
    %281 = vector.load %arg12[%c0_27, %c0_28, %c0_29, %c0_30] : memref<1x4x16x4xf32, #tpu.memory_space<vmem>>, vector<1x4x16x4xf32>
    %282 = vector.shape_cast %281 : vector<1x4x16x4xf32> to vector<4x16x4xf32>
    %283 = vector.shape_cast %280 : vector<4x16x4xf32> to vector<1x4x16x4xf32>
    tpu.vector_store %arg12[%c0_27, %c0_28, %c0_29, %c0_30], %283 {strides = array<i32>} : memref<1x4x16x4xf32, #tpu.memory_space<vmem>>, vector<1x4x16x4xf32>,
    return
  }
  func.func @transform_0(%arg0: i32, %arg1: i32) -> (i32, i32, i32, i32) {
    %c0_i32 = arith.constant 0 : i32
    %c0_i32_0 = arith.constant 0 : i32
    %c0_i32_1 = arith.constant 0 : i32
    %c0_i32_2 = arith.constant 0 : i32
    return %arg0, %c0_i32, %c0_i32_0, %c0_i32_1 : i32, i32, i32, i32
  }
  func.func @transform_1(%arg0: i32, %arg1: i32) -> (i32, i32) {
    %c0_i32 = arith.constant 0 : i32
    %c0_i32_0 = arith.constant 0 : i32
    %c0_i32_1 = arith.constant 0 : i32
    return %c0_i32, %c0_i32_0 : i32, i32
  }
  func.func @transform_2(%arg0: i32, %arg1: i32) -> (i32, i32) {
    %c0_i32 = arith.constant 0 : i32
    %c0_i32_0 = arith.constant 0 : i32
    %c0_i32_1 = arith.constant 0 : i32
    return %c0_i32, %c0_i32_0 : i32, i32
  }
  func.func @transform_3(%arg0: i32, %arg1: i32) -> (i32, i32) {
    %c0_i32 = arith.constant 0 : i32
    %c0_i32_0 = arith.constant 0 : i32
    %c0_i32_1 = arith.constant 0 : i32
    return %c0_i32, %c0_i32_0 : i32, i32
  }
  func.func @transform_4(%arg0: i32, %arg1: i32) -> (i32, i32, i32) {
    %c0_i32 = arith.constant 0 : i32
    %c0_i32_0 = arith.constant 0 : i32
    %c0_i32_1 = arith.constant 0 : i32
    %c0_i32_2 = arith.constant 0 : i32
    return %c0_i32, %c0_i32_0, %c0_i32_1 : i32, i32, i32
  }
  func.func @transform_5(%arg0: i32, %arg1: i32) -> (i32, i32) {
    %c0_i32 = arith.constant 0 : i32
    %c0_i32_0 = arith.constant 0 : i32
    %c0_i32_1 = arith.constant 0 : i32
    return %c0_i32, %c0_i32_0 : i32, i32
  }
  func.func @transform_6(%arg0: i32, %arg1: i32) -> (i32, i32) {
    %c0_i32 = arith.constant 0 : i32
    %c0_i32_0 = arith.constant 0 : i32
    %c0_i32_1 = arith.constant 0 : i32
    return %c0_i32, %c0_i32_0 : i32, i32
  }
  func.func @transform_7(%arg0: i32, %arg1: i32) -> (i32, i32) {
    %c0_i32 = arith.constant 0 : i32
    %c0_i32_0 = arith.constant 0 : i32
    %c0_i32_1 = arith.constant 0 : i32
    return %c0_i32, %c0_i32_0 : i32, i32
  }
  func.func @transform_8(%arg0: i32, %arg1: i32) -> (i32, i32) {
    %c0_i32 = arith.constant 0 : i32
    %c0_i32_0 = arith.constant 0 : i32
    %c0_i32_1 = arith.constant 0 : i32
    return %c0_i32, %c0_i32_0 : i32, i32
  }
  func.func @transform_9(%arg0: i32, %arg1: i32) -> (i32, i32) {
    %c0_i32 = arith.constant 0 : i32
    %c0_i32_0 = arith.constant 0 : i32
    %c0_i32_1 = arith.constant 0 : i32
    return %c0_i32, %c0_i32_0 : i32, i32
  }
  func.func @transform_10(%arg0: i32, %arg1: i32) -> (i32, i32, i32, i32) {
    %c0_i32 = arith.constant 0 : i32
    %c0_i32_0 = arith.constant 0 : i32
    %c0_i32_1 = arith.constant 0 : i32
    return %arg0, %arg1, %c0_i32, %c0_i32_0 : i32, i32, i32, i32
  }
}

</mosaic_0001>

<llo_original>
// kernel: tpu_custom_call.1
$region0: #{tpu_custom_call.1}
  #allocation0 [shape = 'u32[]', space=smem, size = 0x4, offset = 0x4, fixed_abs, tag = 'smem constant byte address 0x4 - core index']
  #allocation1 [shape = 'u32[144,128]{1,0:T(1,128)}', space=vmem, size = 0x12000, scoped, tag = 'internal scratch']
  %s0 = inlined_call_operand.vmem [shape: f32[2,18,18,4], index: 0, kind: input, shape index: {}]
  %s1 = inlined_call_operand.vmem [shape: f32[4,16], index: 1, kind: input, shape index: {}]
  %s2 = inlined_call_operand.vmem [shape: f32[1,16], index: 2, kind: input, shape index: {}]
  %s3 = inlined_call_operand.vmem [shape: f32[1,16], index: 3, kind: input, shape index: {}]
  %s4 = inlined_call_operand.vmem [shape: f32[3,3,16], index: 4, kind: input, shape index: {}]
  %s5 = inlined_call_operand.vmem [shape: f32[1,16], index: 5, kind: input, shape index: {}]
  %s6 = inlined_call_operand.vmem [shape: f32[1,16], index: 6, kind: input, shape index: {}]
  %s7 = inlined_call_operand.vmem [shape: f32[16,4], index: 7, kind: input, shape index: {}]
  %s8 = inlined_call_operand.vmem [shape: f32[1,4], index: 8, kind: input, shape index: {}]
  %s9 = inlined_call_operand.vmem [shape: f32[1,4], index: 9, kind: input, shape index: {}]
  %s10 = inlined_call_operand.vmem [shape: f32[2,16,16,4], index: 10, kind: output, shape index: {}]
  %s11 = sld [smem:[#allocation0]]
  $region73: #{tpu_custom_call.1} parent=0
    _
  %s13 = ssub.s32 1, %s11
  %s14 = scalar_select 0, %s13, %s11
  loop: start=0, step=1, limit=10
  $region2: #{tpu_custom_call.1} parent=0 // loop_pre_header
    _
  $region3: #{tpu_custom_call.1} parent=0 // loop_header
    %s16 = sphi 0, %s20
    %p17 = scmp.ge.s32.totalorder %s16, 10
    %s23 = sphi 0, %s35
    %s24 = sphi 0, %s31
    %s25 = sphi 0, %s23
    %s26 = sphi 0, %s24
    %s27 = sphi 0, %s25
    %s28 = sphi 0, %s26
    %s38 = sphi 0, %s40
    %s41 = sphi 0, %s38
    %s42 = sphi 0, %s41
    %s58 = sphi 0, %s42
    %s62 = sphi 0, %s62
    %s64 = sphi 0, %s62
    %s65 = sphi 0, %s64
    %s79 = sphi 0, %s65
    %s83 = sphi 0, %s83
    %s85 = sphi 0, %s83
    %s86 = sphi 0, %s85
    %s100 = sphi 0, %s86
    %s104 = sphi 0, %s104
    %s106 = sphi 0, %s104
    %s107 = sphi 0, %s106
    %s121 = sphi 0, %s107
    %s125 = sphi 0, %s125
    %s127 = sphi 0, %s125
    %s128 = sphi 0, %s127
    %s142 = sphi 0, %s128
    %s146 = sphi 0, %s146
    %s148 = sphi 0, %s146
    %s149 = sphi 0, %s148
    %s163 = sphi 0, %s149
    %s167 = sphi 0, %s167
    %s169 = sphi 0, %s167
    %s170 = sphi 0, %s169
    %s184 = sphi 0, %s170
    %s188 = sphi 0, %s188
    %s190 = sphi 0, %s188
    %s191 = sphi 0, %s190
    %s205 = sphi 0, %s191
    %s209 = sphi 0, %s209
    %s211 = sphi 0, %s209
    %s212 = sphi 0, %s211
    %s226 = sphi 0, %s212
    %s230 = sphi 0, %s230
    %s232 = sphi 0, %s230
    %s233 = sphi 0, %s232
    %s247 = sphi 0, %s233
    %s255 = sphi 0, %s257
    %s258 = sphi 0, %s255
    %s259 = sphi 0, %s258
    %s275 = sphi 0, %s259
  $region4: #{tpu_custom_call.1} parent=0 // loop_header_branch
    %19 = sbr.rel (%p17) target = $region8
  $region5: #{tpu_custom_call.1} parent=0 // loop_body
    %s21 = ssub.s32 %s16, 1
    %s22 = ssub.s32 %s16, 2
    %s29 = sadd.s32 1, %s24
    %p30 = scmp.ge.s32.totalorder %s29, 4
    %s31 = scalar_select %p30, 0, %s29
    %s32 = sadd.s32 1, %s23
    %s33 = scalar_select %p30, %s32, %s23
    %p34 = scmp.ge.s32.totalorder %s33, 2
    %s35 = scalar_select %p34, 0, %s33
    %s36 = ssub.s32 %s23, %s35
    %p37 = scmp.eq.s32.totalorder %s36, 0
    %s39 = sadd.s32 %s38, 1
    %s40 = scalar_select %p37, %s38, %s39
    %p43 = pneg %p37
    %p44 = scmp.eq.s32.totalorder %s16, 7
    %p45 = por %p43, %p44
    %p46 = scmp.ne.s32.totalorder %s38, %s41
    %p47 = scmp.eq.s32.totalorder %s16, 0
    %p48 = por %p46, %p47
    %p49 = scmp.ne.s32.totalorder %s38, %s41
    %p50 = scmp.eq.s32.totalorder %s21, 7
    %p51 = por %p49, %p50
    %p52 = scmp.ne.s32.totalorder %s41, %s42
    %p53 = scmp.eq.s32.totalorder %s21, 0
    %p54 = por %p52, %p53
    %p55 = scmp.ne.s32.totalorder %s41, %s42
    %p56 = scmp.eq.s32.totalorder %s22, 7
    %p57 = por %p55, %p56
    %p59 = scmp.ne.s32.totalorder %s42, %s58
    %p60 = scmp.eq.s32.totalorder %s22, 0
    %p61 = por %p59, %p60
    %s63 = sadd.s32 %s62, 1
    %p66 = scmp.eq.s32.totalorder %s16, 7
    %p67 = scmp.ne.s32.totalorder %s62, %s64
    %p68 = scmp.eq.s32.totalorder %s16, 0
    %p69 = por %p67, %p68
    %p70 = scmp.ne.s32.totalorder %s62, %s64
    %p71 = scmp.eq.s32.totalorder %s21, 7
    %p72 = por %p70, %p71
    %p73 = scmp.ne.s32.totalorder %s64, %s65
    %p74 = scmp.eq.s32.totalorder %s21, 0
    %p75 = por %p73, %p74
    %p76 = scmp.ne.s32.totalorder %s64, %s65
    %p77 = scmp.eq.s32.totalorder %s22, 7
    %p78 = por %p76, %p77
    %p80 = scmp.ne.s32.totalorder %s65, %s79
    %p81 = scmp.eq.s32.totalorder %s22, 0
    %p82 = por %p80, %p81
    %s84 = sadd.s32 %s83, 1
    %p87 = scmp.eq.s32.totalorder %s16, 7
    %p88 = scmp.ne.s32.totalorder %s83, %s85
    %p89 = scmp.eq.s32.totalorder %s16, 0
    %p90 = por %p88, %p89
    %p91 = scmp.ne.s32.totalorder %s83, %s85
    %p92 = scmp.eq.s32.totalorder %s21, 7
    %p93 = por %p91, %p92
    %p94 = scmp.ne.s32.totalorder %s85, %s86
    %p95 = scmp.eq.s32.totalorder %s21, 0
    %p96 = por %p94, %p95
    %p97 = scmp.ne.s32.totalorder %s85, %s86
    %p98 = scmp.eq.s32.totalorder %s22, 7
    %p99 = por %p97, %p98
    %p101 = scmp.ne.s32.totalorder %s86, %s100
    %p102 = scmp.eq.s32.totalorder %s22, 0
    %p103 = por %p101, %p102
    %s105 = sadd.s32 %s104, 1
    %p108 = scmp.eq.s32.totalorder %s16, 7
    %p109 = scmp.ne.s32.totalorder %s104, %s106
    %p110 = scmp.eq.s32.totalorder %s16, 0
    %p111 = por %p109, %p110
    %p112 = scmp.ne.s32.totalorder %s104, %s106
    %p113 = scmp.eq.s32.totalorder %s21, 7
    %p114 = por %p112, %p113
    %p115 = scmp.ne.s32.totalorder %s106, %s107
    %p116 = scmp.eq.s32.totalorder %s21, 0
    %p117 = por %p115, %p116
    %p118 = scmp.ne.s32.totalorder %s106, %s107
    %p119 = scmp.eq.s32.totalorder %s22, 7
    %p120 = por %p118, %p119
    %p122 = scmp.ne.s32.totalorder %s107, %s121
    %p123 = scmp.eq.s32.totalorder %s22, 0
    %p124 = por %p122, %p123
    %s126 = sadd.s32 %s125, 1
    %p129 = scmp.eq.s32.totalorder %s16, 7
    %p130 = scmp.ne.s32.totalorder %s125, %s127
    %p131 = scmp.eq.s32.totalorder %s16, 0
    %p132 = por %p130, %p131
    %p133 = scmp.ne.s32.totalorder %s125, %s127
    %p134 = scmp.eq.s32.totalorder %s21, 7
    %p135 = por %p133, %p134
    %p136 = scmp.ne.s32.totalorder %s127, %s128
    %p137 = scmp.eq.s32.totalorder %s21, 0
    %p138 = por %p136, %p137
    %p139 = scmp.ne.s32.totalorder %s127, %s128
    %p140 = scmp.eq.s32.totalorder %s22, 7
    %p141 = por %p139, %p140
    %p143 = scmp.ne.s32.totalorder %s128, %s142
    %p144 = scmp.eq.s32.totalorder %s22, 0
    %p145 = por %p143, %p144
    %s147 = sadd.s32 %s146, 1
    %p150 = scmp.eq.s32.totalorder %s16, 7
    %p151 = scmp.ne.s32.totalorder %s146, %s148
    %p152 = scmp.eq.s32.totalorder %s16, 0
    %p153 = por %p151, %p152
    %p154 = scmp.ne.s32.totalorder %s146, %s148
    %p155 = scmp.eq.s32.totalorder %s21, 7
    %p156 = por %p154, %p155
    %p157 = scmp.ne.s32.totalorder %s148, %s149
    %p158 = scmp.eq.s32.totalorder %s21, 0
    %p159 = por %p157, %p158
    %p160 = scmp.ne.s32.totalorder %s148, %s149
    %p161 = scmp.eq.s32.totalorder %s22, 7
    %p162 = por %p160, %p161
    %p164 = scmp.ne.s32.totalorder %s149, %s163
    %p165 = scmp.eq.s32.totalorder %s22, 0
    %p166 = por %p164, %p165
    %s168 = sadd.s32 %s167, 1
    %p171 = scmp.eq.s32.totalorder %s16, 7
    %p172 = scmp.ne.s32.totalorder %s167, %s169
    %p173 = scmp.eq.s32.totalorder %s16, 0
    %p174 = por %p172, %p173
    %p175 = scmp.ne.s32.totalorder %s167, %s169
    %p176 = scmp.eq.s32.totalorder %s21, 7
    %p177 = por %p175, %p176
    %p178 = scmp.ne.s32.totalorder %s169, %s170
    %p179 = scmp.eq.s32.totalorder %s21, 0
    %p180 = por %p178, %p179
    %p181 = scmp.ne.s32.totalorder %s169, %s170
    %p182 = scmp.eq.s32.totalorder %s22, 7
    %p183 = por %p181, %p182
    %p185 = scmp.ne.s32.totalorder %s170, %s184
    %p186 = scmp.eq.s32.totalorder %s22, 0
    %p187 = por %p185, %p186
    %s189 = sadd.s32 %s188, 1
    %p192 = scmp.eq.s32.totalorder %s16, 7
    %p193 = scmp.ne.s32.totalorder %s188, %s190
    %p194 = scmp.eq.s32.totalorder %s16, 0
    %p195 = por %p193, %p194
    %p196 = scmp.ne.s32.totalorder %s188, %s190
    %p197 = scmp.eq.s32.totalorder %s21, 7
    %p198 = por %p196, %p197
    %p199 = scmp.ne.s32.totalorder %s190, %s191
    %p200 = scmp.eq.s32.totalorder %s21, 0
    %p201 = por %p199, %p200
    %p202 = scmp.ne.s32.totalorder %s190, %s191
    %p203 = scmp.eq.s32.totalorder %s22, 7
    %p204 = por %p202, %p203
    %p206 = scmp.ne.s32.totalorder %s191, %s205
    %p207 = scmp.eq.s32.totalorder %s22, 0
    %p208 = por %p206, %p207
    %s210 = sadd.s32 %s209, 1
    %p213 = scmp.eq.s32.totalorder %s16, 7
    %p214 = scmp.ne.s32.totalorder %s209, %s211
    %p215 = scmp.eq.s32.totalorder %s16, 0
    %p216 = por %p214, %p215
    %p217 = scmp.ne.s32.totalorder %s209, %s211
    %p218 = scmp.eq.s32.totalorder %s21, 7
    %p219 = por %p217, %p218
    %p220 = scmp.ne.s32.totalorder %s211, %s212
    %p221 = scmp.eq.s32.totalorder %s21, 0
    %p222 = por %p220, %p221
    %p223 = scmp.ne.s32.totalorder %s211, %s212
    %p224 = scmp.eq.s32.totalorder %s22, 7
    %p225 = por %p223, %p224
    %p227 = scmp.ne.s32.totalorder %s212, %s226
    %p228 = scmp.eq.s32.totalorder %s22, 0
    %p229 = por %p227, %p228
    %s231 = sadd.s32 %s230, 1
    %p234 = scmp.eq.s32.totalorder %s16, 7
    %p235 = scmp.ne.s32.totalorder %s230, %s232
    %p236 = scmp.eq.s32.totalorder %s16, 0
    %p237 = por %p235, %p236
    %p238 = scmp.ne.s32.totalorder %s230, %s232
    %p239 = scmp.eq.s32.totalorder %s21, 7
    %p240 = por %p238, %p239
    %p241 = scmp.ne.s32.totalorder %s232, %s233
    %p242 = scmp.eq.s32.totalorder %s21, 0
    %p243 = por %p241, %p242
    %p244 = scmp.ne.s32.totalorder %s232, %s233
    %p245 = scmp.eq.s32.totalorder %s22, 7
    %p246 = por %p244, %p245
    %p248 = scmp.ne.s32.totalorder %s233, %s247
    %p249 = scmp.eq.s32.totalorder %s22, 0
    %p250 = por %p248, %p249
    %s251 = ssub.s32 %s23, %s35
    %s252 = ssub.s32 %s24, %s31
    %s253 = sor.u32 %s251, %s252
    %p254 = scmp.eq.s32.totalorder %s253, 0
    %s256 = sadd.s32 %s255, 1
    %s257 = scalar_select %p254, %s255, %s256
    %p260 = pneg %p254
    %p261 = scmp.eq.s32.totalorder %s16, 7
    %p262 = por %p260, %p261
    %p263 = scmp.ne.s32.totalorder %s255, %s258
    %p264 = scmp.eq.s32.totalorder %s16, 0
    %p265 = por %p263, %p264
    %p266 = scmp.ne.s32.totalorder %s255, %s258
    %p267 = scmp.eq.s32.totalorder %s21, 7
    %p268 = por %p266, %p267
    %p269 = scmp.ne.s32.totalorder %s258, %s259
    %p270 = scmp.eq.s32.totalorder %s21, 0
    %p271 = por %p269, %p270
    %p272 = scmp.ne.s32.totalorder %s258, %s259
    %p273 = scmp.eq.s32.totalorder %s22, 7
    %p274 = por %p272, %p273
    %p276 = scmp.ne.s32.totalorder %s259, %s275
    %p277 = scmp.eq.s32.totalorder %s22, 0
    %p278 = por %p276, %p277
    %p279 = scmp.le.s32.totalorder 1, %s16
    %p280 = scmp.lt.s32.totalorder %s16, 9
    %p281 = pnand %p279, %p280
    %p282 = pneg %p281
    // Predicated region
    $region9: #{tpu_custom_call.1} parent=5 // pred_check
      _
    $region10: #{tpu_custom_call.1} parent=5 // pred_check_branch
      %284 = sbr.rel (%p281) target = $region12
    $region11: #{tpu_custom_call.1} parent=5 // pred_region
      %s285 = ssub.s32 %s16, 1
      // Predicated region
      $region13: #{tpu_custom_call.1} parent=11 // pred_check
        %p286 = pneg %p75
      $region14: #{tpu_custom_call.1} parent=11 // pred_check_branch
        %288 = sbr.rel (%p286) target = $region16
      $region15: #{tpu_custom_call.1} parent=11 // pred_region
        _
      $region16: #{tpu_custom_call.1} parent=11 // pred_fallthru
        _
      // Predicated region
      $region17: #{tpu_custom_call.1} parent=11 // pred_check
        %p289 = pneg %p96
      $region18: #{tpu_custom_call.1} parent=11 // pred_check_branch
        %291 = sbr.rel (%p289) target = $region20
      $region19: #{tpu_custom_call.1} parent=11 // pred_region
        _
      $region20: #{tpu_custom_call.1} parent=11 // pred_fallthru
        _
      // Predicated region
      $region21: #{tpu_custom_call.1} parent=11 // pred_check
        %p292 = pneg %p117
      $region22: #{tpu_custom_call.1} parent=11 // pred_check_branch
        %294 = sbr.rel (%p292) target = $region24
      $region23: #{tpu_custom_call.1} parent=11 // pred_region
        _
      $region24: #{tpu_custom_call.1} parent=11 // pred_fallthru
        _
      // Predicated region
      $region25: #{tpu_custom_call.1} parent=11 // pred_check
        %p295 = pneg %p138
      $region26: #{tpu_custom_call.1} parent=11 // pred_check_branch
        %297 = sbr.rel (%p295) target = $region28
      $region27: #{tpu_custom_call.1} parent=11 // pred_region
        _
      $region28: #{tpu_custom_call.1} parent=11 // pred_fallthru
        _
      // Predicated region
      $region29: #{tpu_custom_call.1} parent=11 // pred_check
        %p298 = pneg %p159
      $region30: #{tpu_custom_call.1} parent=11 // pred_check_branch
        %300 = sbr.rel (%p298) target = $region32
      $region31: #{tpu_custom_call.1} parent=11 // pred_region
        _
      $region32: #{tpu_custom_call.1} parent=11 // pred_fallthru
        _
      // Predicated region
      $region33: #{tpu_custom_call.1} parent=11 // pred_check
        %p301 = pneg %p180
      $region34: #{tpu_custom_call.1} parent=11 // pred_check_branch
        %303 = sbr.rel (%p301) target = $region36
      $region35: #{tpu_custom_call.1} parent=11 // pred_region
        _
      $region36: #{tpu_custom_call.1} parent=11 // pred_fallthru
        _
      // Predicated region
      $region37: #{tpu_custom_call.1} parent=11 // pred_check
        %p304 = pneg %p201
      $region38: #{tpu_custom_call.1} parent=11 // pred_check_branch
        %306 = sbr.rel (%p304) target = $region40
      $region39: #{tpu_custom_call.1} parent=11 // pred_region
        _
      $region40: #{tpu_custom_call.1} parent=11 // pred_fallthru
        _
      // Predicated region
      $region41: #{tpu_custom_call.1} parent=11 // pred_check
        %p307 = pneg %p222
      $region42: #{tpu_custom_call.1} parent=11 // pred_check_branch
        %309 = sbr.rel (%p307) target = $region44
      $region43: #{tpu_custom_call.1} parent=11 // pred_region
        _
      $region44: #{tpu_custom_call.1} parent=11 // pred_fallthru
        _
      // Predicated region
      $region45: #{tpu_custom_call.1} parent=11 // pred_check
        %p310 = pneg %p243
      $region46: #{tpu_custom_call.1} parent=11 // pred_check_branch
        %312 = sbr.rel (%p310) target = $region48
      $region47: #{tpu_custom_call.1} parent=11 // pred_region
        _
      $region48: #{tpu_custom_call.1} parent=11 // pred_fallthru
        _
    $region12: #{tpu_custom_call.1} parent=5 // pred_fallthru
      _
    %p313 = scmp.lt.s32.totalorder %s16, 8
    // Predicated region
    $region49: #{tpu_custom_call.1} parent=5 // pred_check
      %p314 = pneg %p313
    $region50: #{tpu_custom_call.1} parent=5 // pred_check_branch
      %316 = sbr.rel (%p314) target = $region52
    $region51: #{tpu_custom_call.1} parent=5 // pred_region
      // Predicated region
      $region53: #{tpu_custom_call.1} parent=51 // pred_check
        %p317 = pneg %p48
      $region54: #{tpu_custom_call.1} parent=51 // pred_check_branch
        %319 = sbr.rel (%p317) target = $region56
      $region55: #{tpu_custom_call.1} parent=51 // pred_region
        %p320 = scmp.lt.s32.totalorder %s23, 1
        %s321 = scalar_select %p320, %s23, 1
        %s322 = smul.addr %s321, 54
        %s323 = smul.addr %s322, 8
        %s324 = scalar_lea.vmem %s0, %s323
      $region56: #{tpu_custom_call.1} parent=51 // pred_fallthru
        _
    $region52: #{tpu_custom_call.1} parent=5 // pred_fallthru
      _
    %p325 = scmp.le.s32.totalorder 1, %s16
    %p326 = scmp.lt.s32.totalorder %s16, 9
    %p327 = pnand %p325, %p326
    %p328 = pneg %p327
    // Predicated region
    $region57: #{tpu_custom_call.1} parent=5 // pred_check
      _
    $region58: #{tpu_custom_call.1} parent=5 // pred_check_branch
      %330 = sbr.rel (%p327) target = $region60
    $region59: #{tpu_custom_call.1} parent=5 // pred_region
      %s331 = ssub.s32 %s16, 1
      %p332 = scmp.lt.s32.totalorder %s25, 1
      %s333 = scalar_select %p332, %s25, 1
      %s334 = smul.addr %s333, 54
      %s335 = smul.addr %s334, 8
      %s336 = scalar_lea.vmem %s0, %s335
      %p337 = pneg %p54
      %p338 = pneg %p51
      %p339 = pneg %p75
      %p340 = pneg %p72
      %p341 = pneg %p96
      %p342 = pneg %p93
      %p343 = pneg %p117
      %p344 = pneg %p114
      %p345 = pneg %p138
      %p346 = pneg %p135
      %p347 = pneg %p159
      %p348 = pneg %p156
      %p349 = pneg %p180
      %p350 = pneg %p177
      %p351 = pneg %p201
      %p352 = pneg %p198
      %p353 = pneg %p222
      %p354 = pneg %p219
      %p355 = pneg %p243
      %p356 = pneg %p240
      %p357 = pneg %p271
      %p358 = pneg %p268
      %s359 = smul.u32 4, %s26
      %p360 = scmp.lt.s32.totalorder %s25, 1
      %s361 = scalar_select %p360, %s25, 1
      %p362 = scmp.lt.s32.totalorder %s359, 15
      %s363 = scalar_select %p362, %s359, 15
      %s364 = smul.addr %s363, 2
      %s365 = smul.addr %s361, 32
      %s366 = sadd.s32 %s364, %s365
      %s367 = smul.addr %s366, 8
      %s368 = scalar_lea.vmem %s10, %s367
      %p369 = scmp.lt.s32.totalorder %s25, 1
      %s370 = scalar_select %p369, %s25, 1
      %s371 = smul.addr %s370, 54
      %s372 = smul.addr %s371, 8
      %s373 = scalar_lea.vmem %s0, %s372
      %s374 = smul.u32 4, %s26
      %p375 = scmp.lt.s32.totalorder %s25, 1
      %s376 = scalar_select %p375, %s25, 1
      %p377 = scmp.lt.s32.totalorder %s374, 15
      %s378 = scalar_select %p377, %s374, 15
      %s379 = smul.addr %s378, 2
      %s380 = smul.addr %s376, 32
      %s381 = sadd.s32 %s379, %s380
      %s382 = smul.addr %s381, 8
      %s383 = scalar_lea.vmem %s10, %s382
      %s384 = smul.u32 4, %s26
      %s385 = smul.u32 %s26, 4
      %s386 = smul.u32 %s385, 24
      %s387 = scalar_lea.vmem %s373, %s386
      %v388 = vld [vmem:[%s387] sm:$0xff]
      %v389 = vld [vmem:[%s387 + $0x8] sm:$0xff]
      %v390 = vld [vmem:[%s387 + $0x10] sm:$0x3]
      %v391 = vld [vmem:[%s387 + $0x18] sm:$0xff]
      %v392 = vld [vmem:[%s387 + $0x20] sm:$0xff]
      %v393 = vld [vmem:[%s387 + $0x28] sm:$0x3]
      %v394 = vld [vmem:[%s387 + $0x30] sm:$0xff]
      %v395 = vld [vmem:[%s387 + $0x38] sm:$0xff]
      %v396 = vld [vmem:[%s387 + $0x40] sm:$0x3]
      %v397 = vld [vmem:[%s387 + $0x48] sm:$0xff]
      %v398 = vld [vmem:[%s387 + $0x50] sm:$0xff]
      %v399 = vld [vmem:[%s387 + $0x58] sm:$0x3]
      %v400 = vld [vmem:[%s387 + $0x60] sm:$0xff]
      %v401 = vld [vmem:[%s387 + $0x68] sm:$0xff]
      %v402 = vld [vmem:[%s387 + $0x70] sm:$0x3]
      %v403 = vld [vmem:[%s387 + $0x78] sm:$0xff]
      %v404 = vld [vmem:[%s387 + $0x80] sm:$0xff]
      %v405 = vld [vmem:[%s387 + $0x88] sm:$0x3]
      %v406 = vld [vmem:[%s1] sm:$0xf]
      %408 = vset.pattern.permute.xlu0 0
      %409 = vperm.xlu0 %408, %v388
      %v410 = vpop.permute.xlu0 %409
      %413 = vset.pattern.permute.xlu0 0
      %414 = vperm.xlu0 %413, %v389
      %v415 = vpop.permute.xlu0 %414
      %418 = vset.pattern.permute.xlu0 0
      %419 = vperm.xlu0 %418, %v390
      %v420 = vpop.permute.xlu0 %419
      %423 = vset.pattern.permute.xlu0 0
      %424 = vperm.xlu0 %423, %v391
      %v425 = vpop.permute.xlu0 %424
      %428 = vset.pattern.permute.xlu0 0
      %429 = vperm.xlu0 %428, %v392
      %v430 = vpop.permute.xlu0 %429
      %433 = vset.pattern.permute.xlu0 0
      %434 = vperm.xlu0 %433, %v393
      %v435 = vpop.permute.xlu0 %434
      %438 = vset.pattern.permute.xlu0 0
      %439 = vperm.xlu0 %438, %v394
      %v440 = vpop.permute.xlu0 %439
      %443 = vset.pattern.permute.xlu0 0
      %444 = vperm.xlu0 %443, %v395
      %v445 = vpop.permute.xlu0 %444
      %448 = vset.pattern.permute.xlu0 0
      %449 = vperm.xlu0 %448, %v396
      %v450 = vpop.permute.xlu0 %449
      %453 = vset.pattern.permute.xlu0 0
      %454 = vperm.xlu0 %453, %v397
      %v455 = vpop.permute.xlu0 %454
      %458 = vset.pattern.permute.xlu0 0
      %459 = vperm.xlu0 %458, %v398
      %v460 = vpop.permute.xlu0 %459
      %463 = vset.pattern.permute.xlu0 0
      %464 = vperm.xlu0 %463, %v399
      %v465 = vpop.permute.xlu0 %464
      %468 = vset.pattern.permute.xlu0 0
      %469 = vperm.xlu0 %468, %v400
      %v470 = vpop.permute.xlu0 %469
      %473 = vset.pattern.permute.xlu0 0
      %474 = vperm.xlu0 %473, %v401
      %v475 = vpop.permute.xlu0 %474
      %478 = vset.pattern.permute.xlu0 0
      %479 = vperm.xlu0 %478, %v402
      %v480 = vpop.permute.xlu0 %479
      %483 = vset.pattern.permute.xlu0 0
      %484 = vperm.xlu0 %483, %v403
      %v485 = vpop.permute.xlu0 %484
      %488 = vset.pattern.permute.xlu0 0
      %489 = vperm.xlu0 %488, %v404
      %v490 = vpop.permute.xlu0 %489
      %493 = vset.pattern.permute.xlu0 0
      %494 = vperm.xlu0 %493, %v405
      %v495 = vpop.permute.xlu0 %494
      %v497 = vlaneseq
      %v498 = vshrl.u32 %v497, 7
      %v499 = vsub.s32 0, %v498
      %v500 = vrot.slane %v406, %v499
      %v501 = vmul.f32 %v410, %v500
      %v502 = vmul.f32 %v415, %v500
      %v503 = vmul.f32 %v420, %v500
      %v504 = vmul.f32 %v425, %v500
      %v505 = vmul.f32 %v430, %v500
      %v506 = vmul.f32 %v435, %v500
      %v507 = vmul.f32 %v440, %v500
      %v508 = vmul.f32 %v445, %v500
      %v509 = vmul.f32 %v450, %v500
      %v510 = vmul.f32 %v455, %v500
      %v511 = vmul.f32 %v460, %v500
      %v512 = vmul.f32 %v465, %v500
      %v513 = vmul.f32 %v470, %v500
      %v514 = vmul.f32 %v475, %v500
      %v515 = vmul.f32 %v480, %v500
      %v516 = vmul.f32 %v485, %v500
      %v517 = vmul.f32 %v490, %v500
      %v518 = vmul.f32 %v495, %v500
      %519 = vset.pattern.permute.xlu0 1
      %520 = vperm.xlu0 %519, %v388
      %v521 = vpop.permute.xlu0 %520
      %523 = vset.pattern.permute.xlu0 1
      %524 = vperm.xlu0 %523, %v389
      %v525 = vpop.permute.xlu0 %524
      %527 = vset.pattern.permute.xlu0 1
      %528 = vperm.xlu0 %527, %v390
      %v529 = vpop.permute.xlu0 %528
      %531 = vset.pattern.permute.xlu0 1
      %532 = vperm.xlu0 %531, %v391
      %v533 = vpop.permute.xlu0 %532
      %535 = vset.pattern.permute.xlu0 1
      %536 = vperm.xlu0 %535, %v392
      %v537 = vpop.permute.xlu0 %536
      %539 = vset.pattern.permute.xlu0 1
      %540 = vperm.xlu0 %539, %v393
      %v541 = vpop.permute.xlu0 %540
      %543 = vset.pattern.permute.xlu0 1
      %544 = vperm.xlu0 %543, %v394
      %v545 = vpop.permute.xlu0 %544
      %547 = vset.pattern.permute.xlu0 1
      %548 = vperm.xlu0 %547, %v395
      %v549 = vpop.permute.xlu0 %548
      %551 = vset.pattern.permute.xlu0 1
      %552 = vperm.xlu0 %551, %v396
      %v553 = vpop.permute.xlu0 %552
      %555 = vset.pattern.permute.xlu0 1
      %556 = vperm.xlu0 %555, %v397
      %v557 = vpop.permute.xlu0 %556
      %559 = vset.pattern.permute.xlu0 1
      %560 = vperm.xlu0 %559, %v398
      %v561 = vpop.permute.xlu0 %560
      %563 = vset.pattern.permute.xlu0 1
      %564 = vperm.xlu0 %563, %v399
      %v565 = vpop.permute.xlu0 %564
      %567 = vset.pattern.permute.xlu0 1
      %568 = vperm.xlu0 %567, %v400
      %v569 = vpop.permute.xlu0 %568
      %571 = vset.pattern.permute.xlu0 1
      %572 = vperm.xlu0 %571, %v401
      %v573 = vpop.permute.xlu0 %572
      %575 = vset.pattern.permute.xlu0 1
      %576 = vperm.xlu0 %575, %v402
      %v577 = vpop.permute.xlu0 %576
      %579 = vset.pattern.permute.xlu0 1
      %580 = vperm.xlu0 %579, %v403
      %v581 = vpop.permute.xlu0 %580
      %583 = vset.pattern.permute.xlu0 1
      %584 = vperm.xlu0 %583, %v404
      %v585 = vpop.permute.xlu0 %584
      %587 = vset.pattern.permute.xlu0 1
      %588 = vperm.xlu0 %587, %v405
      %v589 = vpop.permute.xlu0 %588
      %v591 = vlaneseq
      %v592 = vshrl.u32 %v591, 7
      %v593 = vsub.s32 1, %v592
      %v594 = vrot.slane %v406, %v593
      %v595 = vmul.f32 %v521, %v594
      %v596 = vmul.f32 %v525, %v594
      %v597 = vmul.f32 %v529, %v594
      %v598 = vmul.f32 %v533, %v594
      %v599 = vmul.f32 %v537, %v594
      %v600 = vmul.f32 %v541, %v594
      %v601 = vmul.f32 %v545, %v594
      %v602 = vmul.f32 %v549, %v594
      %v603 = vmul.f32 %v553, %v594
      %v604 = vmul.f32 %v557, %v594
      %v605 = vmul.f32 %v561, %v594
      %v606 = vmul.f32 %v565, %v594
      %v607 = vmul.f32 %v569, %v594
      %v608 = vmul.f32 %v573, %v594
      %v609 = vmul.f32 %v577, %v594
      %v610 = vmul.f32 %v581, %v594
      %v611 = vmul.f32 %v585, %v594
      %v612 = vmul.f32 %v589, %v594
      %v613 = vadd.f32 %v501, %v595
      %v614 = vadd.f32 %v502, %v596
      %v615 = vadd.f32 %v503, %v597
      %v616 = vadd.f32 %v504, %v598
      %v617 = vadd.f32 %v505, %v599
      %v618 = vadd.f32 %v506, %v600
      %v619 = vadd.f32 %v507, %v601
      %v620 = vadd.f32 %v508, %v602
      %v621 = vadd.f32 %v509, %v603
      %v622 = vadd.f32 %v510, %v604
      %v623 = vadd.f32 %v511, %v605
      %v624 = vadd.f32 %v512, %v606
      %v625 = vadd.f32 %v513, %v607
      %v626 = vadd.f32 %v514, %v608
      %v627 = vadd.f32 %v515, %v609
      %v628 = vadd.f32 %v516, %v610
      %v629 = vadd.f32 %v517, %v611
      %v630 = vadd.f32 %v518, %v612
      %631 = vset.pattern.permute.xlu0 2
      %632 = vperm.xlu0 %631, %v388
      %v633 = vpop.permute.xlu0 %632
      %635 = vset.pattern.permute.xlu0 2
      %636 = vperm.xlu0 %635, %v389
      %v637 = vpop.permute.xlu0 %636
      %639 = vset.pattern.permute.xlu0 2
      %640 = vperm.xlu0 %639, %v390
      %v641 = vpop.permute.xlu0 %640
      %643 = vset.pattern.permute.xlu0 2
      %644 = vperm.xlu0 %643, %v391
      %v645 = vpop.permute.xlu0 %644
      %647 = vset.pattern.permute.xlu0 2
      %648 = vperm.xlu0 %647, %v392
      %v649 = vpop.permute.xlu0 %648
      %651 = vset.pattern.permute.xlu0 2
      %652 = vperm.xlu0 %651, %v393
      %v653 = vpop.permute.xlu0 %652
      %655 = vset.pattern.permute.xlu0 2
      %656 = vperm.xlu0 %655, %v394
      %v657 = vpop.permute.xlu0 %656
      %659 = vset.pattern.permute.xlu0 2
      %660 = vperm.xlu0 %659, %v395
      %v661 = vpop.permute.xlu0 %660
      %663 = vset.pattern.permute.xlu0 2
      %664 = vperm.xlu0 %663, %v396
      %v665 = vpop.permute.xlu0 %664
      %667 = vset.pattern.permute.xlu0 2
      %668 = vperm.xlu0 %667, %v397
      %v669 = vpop.permute.xlu0 %668
      %671 = vset.pattern.permute.xlu0 2
      %672 = vperm.xlu0 %671, %v398
      %v673 = vpop.permute.xlu0 %672
      %675 = vset.pattern.permute.xlu0 2
      %676 = vperm.xlu0 %675, %v399
      %v677 = vpop.permute.xlu0 %676
      %679 = vset.pattern.permute.xlu0 2
      %680 = vperm.xlu0 %679, %v400
      %v681 = vpop.permute.xlu0 %680
      %683 = vset.pattern.permute.xlu0 2
      %684 = vperm.xlu0 %683, %v401
      %v685 = vpop.permute.xlu0 %684
      %687 = vset.pattern.permute.xlu0 2
      %688 = vperm.xlu0 %687, %v402
      %v689 = vpop.permute.xlu0 %688
      %691 = vset.pattern.permute.xlu0 2
      %692 = vperm.xlu0 %691, %v403
      %v693 = vpop.permute.xlu0 %692
      %695 = vset.pattern.permute.xlu0 2
      %696 = vperm.xlu0 %695, %v404
      %v697 = vpop.permute.xlu0 %696
      %699 = vset.pattern.permute.xlu0 2
      %700 = vperm.xlu0 %699, %v405
      %v701 = vpop.permute.xlu0 %700
      %v703 = vlaneseq
      %v704 = vshrl.u32 %v703, 7
      %v705 = vsub.s32 2, %v704
      %v706 = vrot.slane %v406, %v705
      %v707 = vmul.f32 %v633, %v706
      %v708 = vmul.f32 %v637, %v706
      %v709 = vmul.f32 %v641, %v706
      %v710 = vmul.f32 %v645, %v706
      %v711 = vmul.f32 %v649, %v706
      %v712 = vmul.f32 %v653, %v706
      %v713 = vmul.f32 %v657, %v706
      %v714 = vmul.f32 %v661, %v706
      %v715 = vmul.f32 %v665, %v706
      %v716 = vmul.f32 %v669, %v706
      %v717 = vmul.f32 %v673, %v706
      %v718 = vmul.f32 %v677, %v706
      %v719 = vmul.f32 %v681, %v706
      %v720 = vmul.f32 %v685, %v706
      %v721 = vmul.f32 %v689, %v706
      %v722 = vmul.f32 %v693, %v706
      %v723 = vmul.f32 %v697, %v706
      %v724 = vmul.f32 %v701, %v706
      %v725 = vadd.f32 %v613, %v707
      %v726 = vadd.f32 %v614, %v708
      %v727 = vadd.f32 %v615, %v709
      %v728 = vadd.f32 %v616, %v710
      %v729 = vadd.f32 %v617, %v711
      %v730 = vadd.f32 %v618, %v712
      %v731 = vadd.f32 %v619, %v713
      %v732 = vadd.f32 %v620, %v714
      %v733 = vadd.f32 %v621, %v715
      %v734 = vadd.f32 %v622, %v716
      %v735 = vadd.f32 %v623, %v717
      %v736 = vadd.f32 %v624, %v718
      %v737 = vadd.f32 %v625, %v719
      %v738 = vadd.f32 %v626, %v720
      %v739 = vadd.f32 %v627, %v721
      %v740 = vadd.f32 %v628, %v722
      %v741 = vadd.f32 %v629, %v723
      %v742 = vadd.f32 %v630, %v724
      %743 = vset.pattern.permute.xlu0 3
      %744 = vperm.xlu0 %743, %v388
      %v745 = vpop.permute.xlu0 %744
      %747 = vset.pattern.permute.xlu0 3
      %748 = vperm.xlu0 %747, %v389
      %v749 = vpop.permute.xlu0 %748
      %751 = vset.pattern.permute.xlu0 3
      %752 = vperm.xlu0 %751, %v390
      %v753 = vpop.permute.xlu0 %752
      %755 = vset.pattern.permute.xlu0 3
      %756 = vperm.xlu0 %755, %v391
      %v757 = vpop.permute.xlu0 %756
      %759 = vset.pattern.permute.xlu0 3
      %760 = vperm.xlu0 %759, %v392
      %v761 = vpop.permute.xlu0 %760
      %763 = vset.pattern.permute.xlu0 3
      %764 = vperm.xlu0 %763, %v393
      %v765 = vpop.permute.xlu0 %764
      %767 = vset.pattern.permute.xlu0 3
      %768 = vperm.xlu0 %767, %v394
      %v769 = vpop.permute.xlu0 %768
      %771 = vset.pattern.permute.xlu0 3
      %772 = vperm.xlu0 %771, %v395
      %v773 = vpop.permute.xlu0 %772
      %775 = vset.pattern.permute.xlu0 3
      %776 = vperm.xlu0 %775, %v396
      %v777 = vpop.permute.xlu0 %776
      %779 = vset.pattern.permute.xlu0 3
      %780 = vperm.xlu0 %779, %v397
      %v781 = vpop.permute.xlu0 %780
      %783 = vset.pattern.permute.xlu0 3
      %784 = vperm.xlu0 %783, %v398
      %v785 = vpop.permute.xlu0 %784
      %787 = vset.pattern.permute.xlu0 3
      %788 = vperm.xlu0 %787, %v399
      %v789 = vpop.permute.xlu0 %788
      %791 = vset.pattern.permute.xlu0 3
      %792 = vperm.xlu0 %791, %v400
      %v793 = vpop.permute.xlu0 %792
      %795 = vset.pattern.permute.xlu0 3
      %796 = vperm.xlu0 %795, %v401
      %v797 = vpop.permute.xlu0 %796
      %799 = vset.pattern.permute.xlu0 3
      %800 = vperm.xlu0 %799, %v402
      %v801 = vpop.permute.xlu0 %800
      %803 = vset.pattern.permute.xlu0 3
      %804 = vperm.xlu0 %803, %v403
      %v805 = vpop.permute.xlu0 %804
      %807 = vset.pattern.permute.xlu0 3
      %808 = vperm.xlu0 %807, %v404
      %v809 = vpop.permute.xlu0 %808
      %811 = vset.pattern.permute.xlu0 3
      %812 = vperm.xlu0 %811, %v405
      %v813 = vpop.permute.xlu0 %812
      %v815 = vlaneseq
      %v816 = vshrl.u32 %v815, 7
      %v817 = vsub.s32 3, %v816
      %v818 = vrot.slane %v406, %v817
      %v819 = vmul.f32 %v745, %v818
      %v820 = vmul.f32 %v749, %v818
      %v821 = vmul.f32 %v753, %v818
      %v822 = vmul.f32 %v757, %v818
      %v823 = vmul.f32 %v761, %v818
      %v824 = vmul.f32 %v765, %v818
      %v825 = vmul.f32 %v769, %v818
      %v826 = vmul.f32 %v773, %v818
      %v827 = vmul.f32 %v777, %v818
      %v828 = vmul.f32 %v781, %v818
      %v829 = vmul.f32 %v785, %v818
      %v830 = vmul.f32 %v789, %v818
      %v831 = vmul.f32 %v793, %v818
      %v832 = vmul.f32 %v797, %v818
      %v833 = vmul.f32 %v801, %v818
      %v834 = vmul.f32 %v805, %v818
      %v835 = vmul.f32 %v809, %v818
      %v836 = vmul.f32 %v813, %v818
      %v837 = vadd.f32 %v725, %v819
      %v838 = vadd.f32 %v726, %v820
      %v839 = vadd.f32 %v727, %v821
      %v840 = vadd.f32 %v728, %v822
      %v841 = vadd.f32 %v729, %v823
      %v842 = vadd.f32 %v730, %v824
      %v843 = vadd.f32 %v731, %v825
      %v844 = vadd.f32 %v732, %v826
      %v845 = vadd.f32 %v733, %v827
      %v846 = vadd.f32 %v734, %v828
      %v847 = vadd.f32 %v735, %v829
      %v848 = vadd.f32 %v736, %v830
      %v849 = vadd.f32 %v737, %v831
      %v850 = vadd.f32 %v738, %v832
      %v851 = vadd.f32 %v739, %v833
      %v852 = vadd.f32 %v740, %v834
      %v853 = vadd.f32 %v741, %v835
      %v854 = vadd.f32 %v742, %v836
      %v855 = vld [vmem:[%s2] sm:$0x1]
      %v857 = vlaneseq
      %v858 = vshrl.u32 %v857, 7
      %v859 = vsub.s32 0, %v858
      %v860 = vrot.slane %v855, %v859
      %v862 = vmul.f32 %v837, %v860
      %v863 = vmul.f32 %v838, %v860
      %v864 = vmul.f32 %v839, %v860
      %v865 = vmul.f32 %v840, %v860
      %v866 = vmul.f32 %v841, %v860
      %v867 = vmul.f32 %v842, %v860
      %v868 = vmul.f32 %v843, %v860
      %v869 = vmul.f32 %v844, %v860
      %v870 = vmul.f32 %v845, %v860
      %v871 = vmul.f32 %v846, %v860
      %v872 = vmul.f32 %v847, %v860
      %v873 = vmul.f32 %v848, %v860
      %v874 = vmul.f32 %v849, %v860
      %v875 = vmul.f32 %v850, %v860
      %v876 = vmul.f32 %v851, %v860
      %v877 = vmul.f32 %v852, %v860
      %v878 = vmul.f32 %v853, %v860
      %v879 = vmul.f32 %v854, %v860
      %v880 = vld [vmem:[%s3] sm:$0x1]
      %v882 = vlaneseq
      %v883 = vshrl.u32 %v882, 7
      %v884 = vsub.s32 0, %v883
      %v885 = vrot.slane %v880, %v884
      %v887 = vadd.f32 %v862, %v885
      %v888 = vadd.f32 %v863, %v885
      %v889 = vadd.f32 %v864, %v885
      %v890 = vadd.f32 %v865, %v885
      %v891 = vadd.f32 %v866, %v885
      %v892 = vadd.f32 %v867, %v885
      %v893 = vadd.f32 %v868, %v885
      %v894 = vadd.f32 %v869, %v885
      %v895 = vadd.f32 %v870, %v885
      %v896 = vadd.f32 %v871, %v885
      %v897 = vadd.f32 %v872, %v885
      %v898 = vadd.f32 %v873, %v885
      %v899 = vadd.f32 %v874, %v885
      %v900 = vadd.f32 %v875, %v885
      %v901 = vadd.f32 %v876, %v885
      %v902 = vadd.f32 %v877, %v885
      %v903 = vadd.f32 %v878, %v885
      %v904 = vadd.f32 %v879, %v885
      %v905 = vmax.f32 %v887, 0.0
      %v906 = vmax.f32 %v888, 0.0
      %v907 = vmax.f32 %v889, 0.0
      %v908 = vmax.f32 %v890, 0.0
      %v909 = vmax.f32 %v891, 0.0
      %v910 = vmax.f32 %v892, 0.0
      %v911 = vmax.f32 %v893, 0.0
      %v912 = vmax.f32 %v894, 0.0
      %v913 = vmax.f32 %v895, 0.0
      %v914 = vmax.f32 %v896, 0.0
      %v915 = vmax.f32 %v897, 0.0
      %v916 = vmax.f32 %v898, 0.0
      %v917 = vmax.f32 %v899, 0.0
      %v918 = vmax.f32 %v900, 0.0
      %v919 = vmax.f32 %v901, 0.0
      %v920 = vmax.f32 %v902, 0.0
      %v921 = vmax.f32 %v903, 0.0
      %v922 = vmax.f32 %v904, 0.0
      %v923 = vstv %s385
      %v924 = vadd.s32 %v923, 1
      %v925 = vadd.s32 %v923, 2
      %v926 = vadd.s32 %v923, 3
      %v927 = vadd.s32 %v923, 4
      %v928 = vadd.s32 %v923, 5
      %v929 = vlaneseq
      %v930 = vshrl.u32 %v929, 7
      %v931 = vadd.s32 %v930, 8
      %v932 = vadd.s32 %v930, 16
      %vm933 = vcmp.ge.s32.totalorder %v923, 1
      %vm934 = vcmp.ge.s32.totalorder %v924, 1
      %vm935 = vcmp.ge.s32.totalorder %v925, 1
      %vm936 = vcmp.ge.s32.totalorder %v926, 1
      %vm937 = vcmp.ge.s32.totalorder %v927, 1
      %vm938 = vcmp.ge.s32.totalorder %v928, 1
      %vm939 = vcmp.lt.s32.totalorder %v923, 17
      %vm940 = vcmp.lt.s32.totalorder %v924, 17
      %vm941 = vcmp.lt.s32.totalorder %v925, 17
      %vm942 = vcmp.lt.s32.totalorder %v926, 17
      %vm943 = vcmp.lt.s32.totalorder %v927, 17
      %vm944 = vcmp.lt.s32.totalorder %v928, 17
      %vm945 = vmand %vm933, %vm939
      %vm946 = vmand %vm934, %vm940
      %vm947 = vmand %vm935, %vm941
      %vm948 = vmand %vm936, %vm942
      %vm949 = vmand %vm937, %vm943
      %vm950 = vmand %vm938, %vm944
      %vm951 = vcmp.ge.s32.totalorder %v930, 1
      %vm952 = vcmp.ge.s32.totalorder %v931, 1
      %vm953 = vcmp.ge.s32.totalorder %v932, 1
      %vm954 = vmand %vm945, %vm951
      %vm955 = vmand %vm945, %vm952
      %vm956 = vmand %vm945, %vm953
      %vm957 = vmand %vm946, %vm951
      %vm958 = vmand %vm946, %vm952
      %vm959 = vmand %vm946, %vm953
      %vm960 = vmand %vm947, %vm951
      %vm961 = vmand %vm947, %vm952
      %vm962 = vmand %vm947, %vm953
      %vm963 = vmand %vm948, %vm951
      %vm964 = vmand %vm948, %vm952
      %vm965 = vmand %vm948, %vm953
      %vm966 = vmand %vm949, %vm951
      %vm967 = vmand %vm949, %vm952
      %vm968 = vmand %vm949, %vm953
      %vm969 = vmand %vm950, %vm951
      %vm970 = vmand %vm950, %vm952
      %vm971 = vmand %vm950, %vm953
      %vm972 = vcmp.lt.s32.totalorder %v930, 17
      %vm973 = vcmp.lt.s32.totalorder %v931, 17
      %vm974 = vcmp.lt.s32.totalorder %v932, 17
      %vm975 = vmand %vm954, %vm972
      %vm976 = vmand %vm955, %vm973
      %vm977 = vmand %vm956, %vm974
      %vm978 = vmand %vm957, %vm972
      %vm979 = vmand %vm958, %vm973
      %vm980 = vmand %vm959, %vm974
      %vm981 = vmand %vm960, %vm972
      %vm982 = vmand %vm961, %vm973
      %vm983 = vmand %vm962, %vm974
      %vm984 = vmand %vm963, %vm972
      %vm985 = vmand %vm964, %vm973
      %vm986 = vmand %vm965, %vm974
      %vm987 = vmand %vm966, %vm972
      %vm988 = vmand %vm967, %vm973
      %vm989 = vmand %vm968, %vm974
      %vm990 = vmand %vm969, %vm972
      %vm991 = vmand %vm970, %vm973
      %vm992 = vmand %vm971, %vm974
      %v993 = vsel %vm975, %v905, 0.0
      %v994 = vsel %vm976, %v906, 0.0
      %v995 = vsel %vm977, %v907, 0.0
      %v996 = vsel %vm978, %v908, 0.0
      %v997 = vsel %vm979, %v909, 0.0
      %v998 = vsel %vm980, %v910, 0.0
      %v999 = vsel %vm981, %v911, 0.0
      %v1000 = vsel %vm982, %v912, 0.0
      %v1001 = vsel %vm983, %v913, 0.0
      %v1002 = vsel %vm984, %v914, 0.0
      %v1003 = vsel %vm985, %v915, 0.0
      %v1004 = vsel %vm986, %v916, 0.0
      %v1005 = vsel %vm987, %v917, 0.0
      %v1006 = vsel %vm988, %v918, 0.0
      %v1007 = vsel %vm989, %v919, 0.0
      %v1008 = vsel %vm990, %v920, 0.0
      %v1009 = vsel %vm991, %v921, 0.0
      %v1010 = vsel %vm992, %v922, 0.0
      %v1011 = vld [vmem:[%s4] sm:$0x7]
      %v1012 = vld [vmem:[%s4 + $0x4] sm:$0x7]
      %v1013 = vld [vmem:[%s4 + $0x8] sm:$0x7]
      %v1014 = vlaneseq
      %v1015 = vshrl.u32 %v1014, 7
      %v1016 = vsub.s32 0, %v1015
      %v1017 = vrot.slane %v1011, %v1016
      %v1018 = vmul.f32 %v993, %v1017
      %v1019 = vmul.f32 %v994, %v1017
      %v1020 = vmul.f32 %v996, %v1017
      %v1021 = vmul.f32 %v997, %v1017
      %v1022 = vmul.f32 %v999, %v1017
      %v1023 = vmul.f32 %v1000, %v1017
      %v1024 = vmul.f32 %v1002, %v1017
      %v1025 = vmul.f32 %v1003, %v1017
      %v1026 = vadd.f32 %v1018, 0.0
      %v1027 = vadd.f32 %v1019, 0.0
      %v1028 = vadd.f32 %v1020, 0.0
      %v1029 = vadd.f32 %v1021, 0.0
      %v1030 = vadd.f32 %v1022, 0.0
      %v1031 = vadd.f32 %v1023, 0.0
      %v1032 = vadd.f32 %v1024, 0.0
      %v1033 = vadd.f32 %v1025, 0.0
      %v1034 = vlaneseq
      %v1035 = vshrl.u32 %v1034, 7
      %v1036 = vsub.s32 0, %v1035
      %v1037 = vrot.slane %v1012, %v1036
      %v1038 = vmul.f32 %v996, %v1037
      %v1039 = vmul.f32 %v997, %v1037
      %v1040 = vmul.f32 %v999, %v1037
      %v1041 = vmul.f32 %v1000, %v1037
      %v1042 = vmul.f32 %v1002, %v1037
      %v1043 = vmul.f32 %v1003, %v1037
      %v1044 = vmul.f32 %v1005, %v1037
      %v1045 = vmul.f32 %v1006, %v1037
      %v1046 = vadd.f32 %v1026, %v1038
      %v1047 = vadd.f32 %v1027, %v1039
      %v1048 = vadd.f32 %v1028, %v1040
      %v1049 = vadd.f32 %v1029, %v1041
      %v1050 = vadd.f32 %v1030, %v1042
      %v1051 = vadd.f32 %v1031, %v1043
      %v1052 = vadd.f32 %v1032, %v1044
      %v1053 = vadd.f32 %v1033, %v1045
      %v1054 = vlaneseq
      %v1055 = vshrl.u32 %v1054, 7
      %v1056 = vsub.s32 0, %v1055
      %v1057 = vrot.slane %v1013, %v1056
      %v1058 = vmul.f32 %v999, %v1057
      %v1059 = vmul.f32 %v1000, %v1057
      %v1060 = vmul.f32 %v1002, %v1057
      %v1061 = vmul.f32 %v1003, %v1057
      %v1062 = vmul.f32 %v1005, %v1057
      %v1063 = vmul.f32 %v1006, %v1057
      %v1064 = vmul.f32 %v1008, %v1057
      %v1065 = vmul.f32 %v1009, %v1057
      %v1066 = vadd.f32 %v1046, %v1058
      %v1067 = vadd.f32 %v1047, %v1059
      %v1068 = vadd.f32 %v1048, %v1060
      %v1069 = vadd.f32 %v1049, %v1061
      %v1070 = vadd.f32 %v1050, %v1062
      %v1071 = vadd.f32 %v1051, %v1063
      %v1072 = vadd.f32 %v1052, %v1064
      %v1073 = vadd.f32 %v1053, %v1065
      %v1074 = vlaneseq
      %v1075 = vshrl.u32 %v1074, 7
      %v1076 = vsub.s32 1, %v1075
      %v1077 = vrot.slane %v1011, %v1076
      %v1078 = vmul.f32 %v993, %v1077
      %v1079 = vmul.f32 %v994, %v1077
      %v1080 = vmul.f32 %v995, %v1077
      %v1081 = vmul.f32 %v996, %v1077
      %v1082 = vmul.f32 %v997, %v1077
      %v1083 = vmul.f32 %v998, %v1077
      %v1084 = vmul.f32 %v999, %v1077
      %v1085 = vmul.f32 %v1000, %v1077
      %v1086 = vmul.f32 %v1001, %v1077
      %v1087 = vmul.f32 %v1002, %v1077
      %v1088 = vmul.f32 %v1003, %v1077
      %v1089 = vmul.f32 %v1004, %v1077
      %vm1102 = vcmask 1046528
      %v1103 = vrot.slane %v1078, 1
      %v1104 = vrot.slane %v1079, 1
      %v1105 = vsel %vm1102, %v1103, %v1104
      %v1106 = vrot.slane %v1080, 1
      %v1107 = vsel %vm1102, %v1104, %v1106
      %v1108 = vrot.slane %v1081, 1
      %v1109 = vrot.slane %v1082, 1
      %v1110 = vsel %vm1102, %v1108, %v1109
      %v1111 = vrot.slane %v1083, 1
      %v1112 = vsel %vm1102, %v1109, %v1111
      %v1113 = vrot.slane %v1084, 1
      %v1114 = vrot.slane %v1085, 1
      %v1115 = vsel %vm1102, %v1113, %v1114
      %v1116 = vrot.slane %v1086, 1
      %v1117 = vsel %vm1102, %v1114, %v1116
      %v1118 = vrot.slane %v1087, 1
      %v1119 = vrot.slane %v1088, 1
      %v1120 = vsel %vm1102, %v1118, %v1119
      %v1121 = vrot.slane %v1089, 1
      %v1122 = vsel %vm1102, %v1119, %v1121
      %v1131 = vadd.f32 %v1066, %v1105
      %v1132 = vadd.f32 %v1067, %v1107
      %v1133 = vadd.f32 %v1068, %v1110
      %v1134 = vadd.f32 %v1069, %v1112
      %v1135 = vadd.f32 %v1070, %v1115
      %v1136 = vadd.f32 %v1071, %v1117
      %v1137 = vadd.f32 %v1072, %v1120
      %v1138 = vadd.f32 %v1073, %v1122
      %v1139 = vlaneseq
      %v1140 = vshrl.u32 %v1139, 7
      %v1141 = vsub.s32 1, %v1140
      %v1142 = vrot.slane %v1012, %v1141
      %v1143 = vmul.f32 %v996, %v1142
      %v1144 = vmul.f32 %v997, %v1142
      %v1145 = vmul.f32 %v998, %v1142
      %v1146 = vmul.f32 %v999, %v1142
      %v1147 = vmul.f32 %v1000, %v1142
      %v1148 = vmul.f32 %v1001, %v1142
      %v1149 = vmul.f32 %v1002, %v1142
      %v1150 = vmul.f32 %v1003, %v1142
      %v1151 = vmul.f32 %v1004, %v1142
      %v1152 = vmul.f32 %v1005, %v1142
      %v1153 = vmul.f32 %v1006, %v1142
      %v1154 = vmul.f32 %v1007, %v1142
      %v1167 = vrot.slane %v1143, 1
      %v1168 = vrot.slane %v1144, 1
      %v1169 = vsel %vm1102, %v1167, %v1168
      %v1170 = vrot.slane %v1145, 1
      %v1171 = vsel %vm1102, %v1168, %v1170
      %v1172 = vrot.slane %v1146, 1
      %v1173 = vrot.slane %v1147, 1
      %v1174 = vsel %vm1102, %v1172, %v1173
      %v1175 = vrot.slane %v1148, 1
      %v1176 = vsel %vm1102, %v1173, %v1175
      %v1177 = vrot.slane %v1149, 1
      %v1178 = vrot.slane %v1150, 1
      %v1179 = vsel %vm1102, %v1177, %v1178
      %v1180 = vrot.slane %v1151, 1
      %v1181 = vsel %vm1102, %v1178, %v1180
      %v1182 = vrot.slane %v1152, 1
      %v1183 = vrot.slane %v1153, 1
      %v1184 = vsel %vm1102, %v1182, %v1183
      %v1185 = vrot.slane %v1154, 1
      %v1186 = vsel %vm1102, %v1183, %v1185
      %v1195 = vadd.f32 %v1131, %v1169
      %v1196 = vadd.f32 %v1132, %v1171
      %v1197 = vadd.f32 %v1133, %v1174
      %v1198 = vadd.f32 %v1134, %v1176
      %v1199 = vadd.f32 %v1135, %v1179
      %v1200 = vadd.f32 %v1136, %v1181
      %v1201 = vadd.f32 %v1137, %v1184
      %v1202 = vadd.f32 %v1138, %v1186
      %v1203 = vlaneseq
      %v1204 = vshrl.u32 %v1203, 7
      %v1205 = vsub.s32 1, %v1204
      %v1206 = vrot.slane %v1013, %v1205
      %v1207 = vmul.f32 %v999, %v1206
      %v1208 = vmul.f32 %v1000, %v1206
      %v1209 = vmul.f32 %v1001, %v1206
      %v1210 = vmul.f32 %v1002, %v1206
      %v1211 = vmul.f32 %v1003, %v1206
      %v1212 = vmul.f32 %v1004, %v1206
      %v1213 = vmul.f32 %v1005, %v1206
      %v1214 = vmul.f32 %v1006, %v1206
      %v1215 = vmul.f32 %v1007, %v1206
      %v1216 = vmul.f32 %v1008, %v1206
      %v1217 = vmul.f32 %v1009, %v1206
      %v1218 = vmul.f32 %v1010, %v1206
      %v1231 = vrot.slane %v1207, 1
      %v1232 = vrot.slane %v1208, 1
      %v1233 = vsel %vm1102, %v1231, %v1232
      %v1234 = vrot.slane %v1209, 1
      %v1235 = vsel %vm1102, %v1232, %v1234
      %v1236 = vrot.slane %v1210, 1
      %v1237 = vrot.slane %v1211, 1
      %v1238 = vsel %vm1102, %v1236, %v1237
      %v1239 = vrot.slane %v1212, 1
      %v1240 = vsel %vm1102, %v1237, %v1239
      %v1241 = vrot.slane %v1213, 1
      %v1242 = vrot.slane %v1214, 1
      %v1243 = vsel %vm1102, %v1241, %v1242
      %v1244 = vrot.slane %v1215, 1
      %v1245 = vsel %vm1102, %v1242, %v1244
      %v1246 = vrot.slane %v1216, 1
      %v1247 = vrot.slane %v1217, 1
      %v1248 = vsel %vm1102, %v1246, %v1247
      %v1249 = vrot.slane %v1218, 1
      %v1250 = vsel %vm1102, %v1247, %v1249
      %v1259 = vadd.f32 %v1195, %v1233
      %v1260 = vadd.f32 %v1196, %v1235
      %v1261 = vadd.f32 %v1197, %v1238
      %v1262 = vadd.f32 %v1198, %v1240
      %v1263 = vadd.f32 %v1199, %v1243
      %v1264 = vadd.f32 %v1200, %v1245
      %v1265 = vadd.f32 %v1201, %v1248
      %v1266 = vadd.f32 %v1202, %v1250
      %v1267 = vlaneseq
      %v1268 = vshrl.u32 %v1267, 7
      %v1269 = vsub.s32 2, %v1268
      %v1270 = vrot.slane %v1011, %v1269
      %v1271 = vmul.f32 %v993, %v1270
      %v1272 = vmul.f32 %v994, %v1270
      %v1273 = vmul.f32 %v995, %v1270
      %v1274 = vmul.f32 %v996, %v1270
      %v1275 = vmul.f32 %v997, %v1270
      %v1276 = vmul.f32 %v998, %v1270
      %v1277 = vmul.f32 %v999, %v1270
      %v1278 = vmul.f32 %v1000, %v1270
      %v1279 = vmul.f32 %v1001, %v1270
      %v1280 = vmul.f32 %v1002, %v1270
      %v1281 = vmul.f32 %v1003, %v1270
      %v1282 = vmul.f32 %v1004, %v1270
      %vm1295 = vcmask 1045504
      %v1296 = vrot.slane %v1271, 2
      %v1297 = vrot.slane %v1272, 2
      %v1298 = vsel %vm1295, %v1296, %v1297
      %v1299 = vrot.slane %v1273, 2
      %v1300 = vsel %vm1295, %v1297, %v1299
      %v1301 = vrot.slane %v1274, 2
      %v1302 = vrot.slane %v1275, 2
      %v1303 = vsel %vm1295, %v1301, %v1302
      %v1304 = vrot.slane %v1276, 2
      %v1305 = vsel %vm1295, %v1302, %v1304
      %v1306 = vrot.slane %v1277, 2
      %v1307 = vrot.slane %v1278, 2
      %v1308 = vsel %vm1295, %v1306, %v1307
      %v1309 = vrot.slane %v1279, 2
      %v1310 = vsel %vm1295, %v1307, %v1309
      %v1311 = vrot.slane %v1280, 2
      %v1312 = vrot.slane %v1281, 2
      %v1313 = vsel %vm1295, %v1311, %v1312
      %v1314 = vrot.slane %v1282, 2
      %v1315 = vsel %vm1295, %v1312, %v1314
      %v1324 = vadd.f32 %v1259, %v1298
      %v1325 = vadd.f32 %v1260, %v1300
      %v1326 = vadd.f32 %v1261, %v1303
      %v1327 = vadd.f32 %v1262, %v1305
      %v1328 = vadd.f32 %v1263, %v1308
      %v1329 = vadd.f32 %v1264, %v1310
      %v1330 = vadd.f32 %v1265, %v1313
      %v1331 = vadd.f32 %v1266, %v1315
      %v1332 = vlaneseq
      %v1333 = vshrl.u32 %v1332, 7
      %v1334 = vsub.s32 2, %v1333
      %v1335 = vrot.slane %v1012, %v1334
      %v1336 = vmul.f32 %v996, %v1335
      %v1337 = vmul.f32 %v997, %v1335
      %v1338 = vmul.f32 %v998, %v1335
      %v1339 = vmul.f32 %v999, %v1335
      %v1340 = vmul.f32 %v1000, %v1335
      %v1341 = vmul.f32 %v1001, %v1335
      %v1342 = vmul.f32 %v1002, %v1335
      %v1343 = vmul.f32 %v1003, %v1335
      %v1344 = vmul.f32 %v1004, %v1335
      %v1345 = vmul.f32 %v1005, %v1335
      %v1346 = vmul.f32 %v1006, %v1335
      %v1347 = vmul.f32 %v1007, %v1335
      %v1360 = vrot.slane %v1336, 2
      %v1361 = vrot.slane %v1337, 2
      %v1362 = vsel %vm1295, %v1360, %v1361
      %v1363 = vrot.slane %v1338, 2
      %v1364 = vsel %vm1295, %v1361, %v1363
      %v1365 = vrot.slane %v1339, 2
      %v1366 = vrot.slane %v1340, 2
      %v1367 = vsel %vm1295, %v1365, %v1366
      %v1368 = vrot.slane %v1341, 2
      %v1369 = vsel %vm1295, %v1366, %v1368
      %v1370 = vrot.slane %v1342, 2
      %v1371 = vrot.slane %v1343, 2
      %v1372 = vsel %vm1295, %v1370, %v1371
      %v1373 = vrot.slane %v1344, 2
      %v1374 = vsel %vm1295, %v1371, %v1373
      %v1375 = vrot.slane %v1345, 2
      %v1376 = vrot.slane %v1346, 2
      %v1377 = vsel %vm1295, %v1375, %v1376
      %v1378 = vrot.slane %v1347, 2
      %v1379 = vsel %vm1295, %v1376, %v1378
      %v1388 = vadd.f32 %v1324, %v1362
      %v1389 = vadd.f32 %v1325, %v1364
      %v1390 = vadd.f32 %v1326, %v1367
      %v1391 = vadd.f32 %v1327, %v1369
      %v1392 = vadd.f32 %v1328, %v1372
      %v1393 = vadd.f32 %v1329, %v1374
      %v1394 = vadd.f32 %v1330, %v1377
      %v1395 = vadd.f32 %v1331, %v1379
      %v1396 = vlaneseq
      %v1397 = vshrl.u32 %v1396, 7
      %v1398 = vsub.s32 2, %v1397
      %v1399 = vrot.slane %v1013, %v1398
      %v1400 = vmul.f32 %v999, %v1399
      %v1401 = vmul.f32 %v1000, %v1399
      %v1402 = vmul.f32 %v1001, %v1399
      %v1403 = vmul.f32 %v1002, %v1399
      %v1404 = vmul.f32 %v1003, %v1399
      %v1405 = vmul.f32 %v1004, %v1399
      %v1406 = vmul.f32 %v1005, %v1399
      %v1407 = vmul.f32 %v1006, %v1399
      %v1408 = vmul.f32 %v1007, %v1399
      %v1409 = vmul.f32 %v1008, %v1399
      %v1410 = vmul.f32 %v1009, %v1399
      %v1411 = vmul.f32 %v1010, %v1399
      %v1424 = vrot.slane %v1400, 2
      %v1425 = vrot.slane %v1401, 2
      %v1426 = vsel %vm1295, %v1424, %v1425
      %v1427 = vrot.slane %v1402, 2
      %v1428 = vsel %vm1295, %v1425, %v1427
      %v1429 = vrot.slane %v1403, 2
      %v1430 = vrot.slane %v1404, 2
      %v1431 = vsel %vm1295, %v1429, %v1430
      %v1432 = vrot.slane %v1405, 2
      %v1433 = vsel %vm1295, %v1430, %v1432
      %v1434 = vrot.slane %v1406, 2
      %v1435 = vrot.slane %v1407, 2
      %v1436 = vsel %vm1295, %v1434, %v1435
      %v1437 = vrot.slane %v1408, 2
      %v1438 = vsel %vm1295, %v1435, %v1437
      %v1439 = vrot.slane %v1409, 2
      %v1440 = vrot.slane %v1410, 2
      %v1441 = vsel %vm1295, %v1439, %v1440
      %v1442 = vrot.slane %v1411, 2
      %v1443 = vsel %vm1295, %v1440, %v1442
      %v1452 = vadd.f32 %v1388, %v1426
      %v1453 = vadd.f32 %v1389, %v1428
      %v1454 = vadd.f32 %v1390, %v1431
      %v1455 = vadd.f32 %v1391, %v1433
      %v1456 = vadd.f32 %v1392, %v1436
      %v1457 = vadd.f32 %v1393, %v1438
      %v1458 = vadd.f32 %v1394, %v1441
      %v1459 = vadd.f32 %v1395, %v1443
      %v1460 = vld [vmem:[%s5] sm:$0x1]
      %v1462 = vlaneseq
      %v1463 = vshrl.u32 %v1462, 7
      %v1464 = vsub.s32 0, %v1463
      %v1465 = vrot.slane %v1460, %v1464
      %v1467 = vmul.f32 %v1452, %v1465
      %v1468 = vmul.f32 %v1453, %v1465
      %v1469 = vmul.f32 %v1454, %v1465
      %v1470 = vmul.f32 %v1455, %v1465
      %v1471 = vmul.f32 %v1456, %v1465
      %v1472 = vmul.f32 %v1457, %v1465
      %v1473 = vmul.f32 %v1458, %v1465
      %v1474 = vmul.f32 %v1459, %v1465
      %v1475 = vld [vmem:[%s6] sm:$0x1]
      %v1477 = vlaneseq
      %v1478 = vshrl.u32 %v1477, 7
      %v1479 = vsub.s32 0, %v1478
      %v1480 = vrot.slane %v1475, %v1479
      %v1482 = vadd.f32 %v1467, %v1480
      %v1483 = vadd.f32 %v1468, %v1480
      %v1484 = vadd.f32 %v1469, %v1480
      %v1485 = vadd.f32 %v1470, %v1480
      %v1486 = vadd.f32 %v1471, %v1480
      %v1487 = vadd.f32 %v1472, %v1480
      %v1488 = vadd.f32 %v1473, %v1480
      %v1489 = vadd.f32 %v1474, %v1480
      %v1490 = vmax.f32 %v1482, 0.0
      %v1491 = vmax.f32 %v1483, 0.0
      %v1492 = vmax.f32 %v1484, 0.0
      %v1493 = vmax.f32 %v1485, 0.0
      %v1494 = vmax.f32 %v1486, 0.0
      %v1495 = vmax.f32 %v1487, 0.0
      %v1496 = vmax.f32 %v1488, 0.0
      %v1497 = vmax.f32 %v1489, 0.0
      %v1498 = vld [vmem:[%s7] sm:$0xff]
      %v1499 = vld [vmem:[%s7 + $0x8] sm:$0xff]
      %1501 = vset.pattern.permute.xlu0 0
      %1502 = vperm.xlu0 %1501, %v1490
      %v1503 = vpop.permute.xlu0 %1502
      %1506 = vset.pattern.permute.xlu0 0
      %1507 = vperm.xlu0 %1506, %v1491
      %v1508 = vpop.permute.xlu0 %1507
      %1511 = vset.pattern.permute.xlu0 0
      %1512 = vperm.xlu0 %1511, %v1492
      %v1513 = vpop.permute.xlu0 %1512
      %1516 = vset.pattern.permute.xlu0 0
      %1517 = vperm.xlu0 %1516, %v1493
      %v1518 = vpop.permute.xlu0 %1517
      %1521 = vset.pattern.permute.xlu0 0
      %1522 = vperm.xlu0 %1521, %v1494
      %v1523 = vpop.permute.xlu0 %1522
      %1526 = vset.pattern.permute.xlu0 0
      %1527 = vperm.xlu0 %1526, %v1495
      %v1528 = vpop.permute.xlu0 %1527
      %1531 = vset.pattern.permute.xlu0 0
      %1532 = vperm.xlu0 %1531, %v1496
      %v1533 = vpop.permute.xlu0 %1532
      %1536 = vset.pattern.permute.xlu0 0
      %1537 = vperm.xlu0 %1536, %v1497
      %v1538 = vpop.permute.xlu0 %1537
      %v1540 = vlaneseq
      %v1541 = vshrl.u32 %v1540, 7
      %v1542 = vsub.s32 0, %v1541
      %v1543 = vrot.slane %v1498, %v1542
      %v1544 = vmul.f32 %v1503, %v1543
      %v1545 = vmul.f32 %v1508, %v1543
      %v1546 = vmul.f32 %v1513, %v1543
      %v1547 = vmul.f32 %v1518, %v1543
      %v1548 = vmul.f32 %v1523, %v1543
      %v1549 = vmul.f32 %v1528, %v1543
      %v1550 = vmul.f32 %v1533, %v1543
      %v1551 = vmul.f32 %v1538, %v1543
      %1552 = vset.pattern.permute.xlu0 1
      %1553 = vperm.xlu0 %1552, %v1490
      %v1554 = vpop.permute.xlu0 %1553
      %1556 = vset.pattern.permute.xlu0 1
      %1557 = vperm.xlu0 %1556, %v1491
      %v1558 = vpop.permute.xlu0 %1557
      %1560 = vset.pattern.permute.xlu0 1
      %1561 = vperm.xlu0 %1560, %v1492
      %v1562 = vpop.permute.xlu0 %1561
      %1564 = vset.pattern.permute.xlu0 1
      %1565 = vperm.xlu0 %1564, %v1493
      %v1566 = vpop.permute.xlu0 %1565
      %1568 = vset.pattern.permute.xlu0 1
      %1569 = vperm.xlu0 %1568, %v1494
      %v1570 = vpop.permute.xlu0 %1569
      %1572 = vset.pattern.permute.xlu0 1
      %1573 = vperm.xlu0 %1572, %v1495
      %v1574 = vpop.permute.xlu0 %1573
      %1576 = vset.pattern.permute.xlu0 1
      %1577 = vperm.xlu0 %1576, %v1496
      %v1578 = vpop.permute.xlu0 %1577
      %1580 = vset.pattern.permute.xlu0 1
      %1581 = vperm.xlu0 %1580, %v1497
      %v1582 = vpop.permute.xlu0 %1581
      %v1584 = vlaneseq
      %v1585 = vshrl.u32 %v1584, 7
      %v1586 = vsub.s32 1, %v1585
      %v1587 = vrot.slane %v1498, %v1586
      %v1588 = vmul.f32 %v1554, %v1587
      %v1589 = vmul.f32 %v1558, %v1587
      %v1590 = vmul.f32 %v1562, %v1587
      %v1591 = vmul.f32 %v1566, %v1587
      %v1592 = vmul.f32 %v1570, %v1587
      %v1593 = vmul.f32 %v1574, %v1587
      %v1594 = vmul.f32 %v1578, %v1587
      %v1595 = vmul.f32 %v1582, %v1587
      %v1596 = vadd.f32 %v1544, %v1588
      %v1597 = vadd.f32 %v1545, %v1589
      %v1598 = vadd.f32 %v1546, %v1590
      %v1599 = vadd.f32 %v1547, %v1591
      %v1600 = vadd.f32 %v1548, %v1592
      %v1601 = vadd.f32 %v1549, %v1593
      %v1602 = vadd.f32 %v1550, %v1594
      %v1603 = vadd.f32 %v1551, %v1595
      %1604 = vset.pattern.permute.xlu0 2
      %1605 = vperm.xlu0 %1604, %v1490
      %v1606 = vpop.permute.xlu0 %1605
      %1608 = vset.pattern.permute.xlu0 2
      %1609 = vperm.xlu0 %1608, %v1491
      %v1610 = vpop.permute.xlu0 %1609
      %1612 = vset.pattern.permute.xlu0 2
      %1613 = vperm.xlu0 %1612, %v1492
      %v1614 = vpop.permute.xlu0 %1613
      %1616 = vset.pattern.permute.xlu0 2
      %1617 = vperm.xlu0 %1616, %v1493
      %v1618 = vpop.permute.xlu0 %1617
      %1620 = vset.pattern.permute.xlu0 2
      %1621 = vperm.xlu0 %1620, %v1494
      %v1622 = vpop.permute.xlu0 %1621
      %1624 = vset.pattern.permute.xlu0 2
      %1625 = vperm.xlu0 %1624, %v1495
      %v1626 = vpop.permute.xlu0 %1625
      %1628 = vset.pattern.permute.xlu0 2
      %1629 = vperm.xlu0 %1628, %v1496
      %v1630 = vpop.permute.xlu0 %1629
      %1632 = vset.pattern.permute.xlu0 2
      %1633 = vperm.xlu0 %1632, %v1497
      %v1634 = vpop.permute.xlu0 %1633
      %v1636 = vlaneseq
      %v1637 = vshrl.u32 %v1636, 7
      %v1638 = vsub.s32 2, %v1637
      %v1639 = vrot.slane %v1498, %v1638
      %v1640 = vmul.f32 %v1606, %v1639
      %v1641 = vmul.f32 %v1610, %v1639
      %v1642 = vmul.f32 %v1614, %v1639
      %v1643 = vmul.f32 %v1618, %v1639
      %v1644 = vmul.f32 %v1622, %v1639
      %v1645 = vmul.f32 %v1626, %v1639
      %v1646 = vmul.f32 %v1630, %v1639
      %v1647 = vmul.f32 %v1634, %v1639
      %v1648 = vadd.f32 %v1596, %v1640
      %v1649 = vadd.f32 %v1597, %v1641
      %v1650 = vadd.f32 %v1598, %v1642
      %v1651 = vadd.f32 %v1599, %v1643
      %v1652 = vadd.f32 %v1600, %v1644
      %v1653 = vadd.f32 %v1601, %v1645
      %v1654 = vadd.f32 %v1602, %v1646
      %v1655 = vadd.f32 %v1603, %v1647
      %1656 = vset.pattern.permute.xlu0 3
      %1657 = vperm.xlu0 %1656, %v1490
      %v1658 = vpop.permute.xlu0 %1657
      %1660 = vset.pattern.permute.xlu0 3
      %1661 = vperm.xlu0 %1660, %v1491
      %v1662 = vpop.permute.xlu0 %1661
      %1664 = vset.pattern.permute.xlu0 3
      %1665 = vperm.xlu0 %1664, %v1492
      %v1666 = vpop.permute.xlu0 %1665
      %1668 = vset.pattern.permute.xlu0 3
      %1669 = vperm.xlu0 %1668, %v1493
      %v1670 = vpop.permute.xlu0 %1669
      %1672 = vset.pattern.permute.xlu0 3
      %1673 = vperm.xlu0 %1672, %v1494
      %v1674 = vpop.permute.xlu0 %1673
      %1676 = vset.pattern.permute.xlu0 3
      %1677 = vperm.xlu0 %1676, %v1495
      %v1678 = vpop.permute.xlu0 %1677
      %1680 = vset.pattern.permute.xlu0 3
      %1681 = vperm.xlu0 %1680, %v1496
      %v1682 = vpop.permute.xlu0 %1681
      %1684 = vset.pattern.permute.xlu0 3
      %1685 = vperm.xlu0 %1684, %v1497
      %v1686 = vpop.permute.xlu0 %1685
      %v1688 = vlaneseq
      %v1689 = vshrl.u32 %v1688, 7
      %v1690 = vsub.s32 3, %v1689
      %v1691 = vrot.slane %v1498, %v1690
      %v1692 = vmul.f32 %v1658, %v1691
      %v1693 = vmul.f32 %v1662, %v1691
      %v1694 = vmul.f32 %v1666, %v1691
      %v1695 = vmul.f32 %v1670, %v1691
      %v1696 = vmul.f32 %v1674, %v1691
      %v1697 = vmul.f32 %v1678, %v1691
      %v1698 = vmul.f32 %v1682, %v1691
      %v1699 = vmul.f32 %v1686, %v1691
      %v1700 = vadd.f32 %v1648, %v1692
      %v1701 = vadd.f32 %v1649, %v1693
      %v1702 = vadd.f32 %v1650, %v1694
      %v1703 = vadd.f32 %v1651, %v1695
      %v1704 = vadd.f32 %v1652, %v1696
      %v1705 = vadd.f32 %v1653, %v1697
      %v1706 = vadd.f32 %v1654, %v1698
      %v1707 = vadd.f32 %v1655, %v1699
      %1708 = vset.pattern.permute.xlu0 4
      %1709 = vperm.xlu0 %1708, %v1490
      %v1710 = vpop.permute.xlu0 %1709
      %1712 = vset.pattern.permute.xlu0 4
      %1713 = vperm.xlu0 %1712, %v1491
      %v1714 = vpop.permute.xlu0 %1713
      %1716 = vset.pattern.permute.xlu0 4
      %1717 = vperm.xlu0 %1716, %v1492
      %v1718 = vpop.permute.xlu0 %1717
      %1720 = vset.pattern.permute.xlu0 4
      %1721 = vperm.xlu0 %1720, %v1493
      %v1722 = vpop.permute.xlu0 %1721
      %1724 = vset.pattern.permute.xlu0 4
      %1725 = vperm.xlu0 %1724, %v1494
      %v1726 = vpop.permute.xlu0 %1725
      %1728 = vset.pattern.permute.xlu0 4
      %1729 = vperm.xlu0 %1728, %v1495
      %v1730 = vpop.permute.xlu0 %1729
      %1732 = vset.pattern.permute.xlu0 4
      %1733 = vperm.xlu0 %1732, %v1496
      %v1734 = vpop.permute.xlu0 %1733
      %1736 = vset.pattern.permute.xlu0 4
      %1737 = vperm.xlu0 %1736, %v1497
      %v1738 = vpop.permute.xlu0 %1737
      %v1740 = vlaneseq
      %v1741 = vshrl.u32 %v1740, 7
      %v1742 = vsub.s32 4, %v1741
      %v1743 = vrot.slane %v1498, %v1742
      %v1744 = vmul.f32 %v1710, %v1743
      %v1745 = vmul.f32 %v1714, %v1743
      %v1746 = vmul.f32 %v1718, %v1743
      %v1747 = vmul.f32 %v1722, %v1743
      %v1748 = vmul.f32 %v1726, %v1743
      %v1749 = vmul.f32 %v1730, %v1743
      %v1750 = vmul.f32 %v1734, %v1743
      %v1751 = vmul.f32 %v1738, %v1743
      %v1752 = vadd.f32 %v1700, %v1744
      %v1753 = vadd.f32 %v1701, %v1745
      %v1754 = vadd.f32 %v1702, %v1746
      %v1755 = vadd.f32 %v1703, %v1747
      %v1756 = vadd.f32 %v1704, %v1748
      %v1757 = vadd.f32 %v1705, %v1749
      %v1758 = vadd.f32 %v1706, %v1750
      %v1759 = vadd.f32 %v1707, %v1751
      %1760 = vset.pattern.permute.xlu0 5
      %1761 = vperm.xlu0 %1760, %v1490
      %v1762 = vpop.permute.xlu0 %1761
      %1764 = vset.pattern.permute.xlu0 5
      %1765 = vperm.xlu0 %1764, %v1491
      %v1766 = vpop.permute.xlu0 %1765
      %1768 = vset.pattern.permute.xlu0 5
      %1769 = vperm.xlu0 %1768, %v1492
      %v1770 = vpop.permute.xlu0 %1769
      %1772 = vset.pattern.permute.xlu0 5
      %1773 = vperm.xlu0 %1772, %v1493
      %v1774 = vpop.permute.xlu0 %1773
      %1776 = vset.pattern.permute.xlu0 5
      %1777 = vperm.xlu0 %1776, %v1494
      %v1778 = vpop.permute.xlu0 %1777
      %1780 = vset.pattern.permute.xlu0 5
      %1781 = vperm.xlu0 %1780, %v1495
      %v1782 = vpop.permute.xlu0 %1781
      %1784 = vset.pattern.permute.xlu0 5
      %1785 = vperm.xlu0 %1784, %v1496
      %v1786 = vpop.permute.xlu0 %1785
      %1788 = vset.pattern.permute.xlu0 5
      %1789 = vperm.xlu0 %1788, %v1497
      %v1790 = vpop.permute.xlu0 %1789
      %v1792 = vlaneseq
      %v1793 = vshrl.u32 %v1792, 7
      %v1794 = vsub.s32 5, %v1793
      %v1795 = vrot.slane %v1498, %v1794
      %v1796 = vmul.f32 %v1762, %v1795
      %v1797 = vmul.f32 %v1766, %v1795
      %v1798 = vmul.f32 %v1770, %v1795
      %v1799 = vmul.f32 %v1774, %v1795
      %v1800 = vmul.f32 %v1778, %v1795
      %v1801 = vmul.f32 %v1782, %v1795
      %v1802 = vmul.f32 %v1786, %v1795
      %v1803 = vmul.f32 %v1790, %v1795
      %v1804 = vadd.f32 %v1752, %v1796
      %v1805 = vadd.f32 %v1753, %v1797
      %v1806 = vadd.f32 %v1754, %v1798
      %v1807 = vadd.f32 %v1755, %v1799
      %v1808 = vadd.f32 %v1756, %v1800
      %v1809 = vadd.f32 %v1757, %v1801
      %v1810 = vadd.f32 %v1758, %v1802
      %v1811 = vadd.f32 %v1759, %v1803
      %1812 = vset.pattern.permute.xlu0 6
      %1813 = vperm.xlu0 %1812, %v1490
      %v1814 = vpop.permute.xlu0 %1813
      %1816 = vset.pattern.permute.xlu0 6
      %1817 = vperm.xlu0 %1816, %v1491
      %v1818 = vpop.permute.xlu0 %1817
      %1820 = vset.pattern.permute.xlu0 6
      %1821 = vperm.xlu0 %1820, %v1492
      %v1822 = vpop.permute.xlu0 %1821
      %1824 = vset.pattern.permute.xlu0 6
      %1825 = vperm.xlu0 %1824, %v1493
      %v1826 = vpop.permute.xlu0 %1825
      %1828 = vset.pattern.permute.xlu0 6
      %1829 = vperm.xlu0 %1828, %v1494
      %v1830 = vpop.permute.xlu0 %1829
      %1832 = vset.pattern.permute.xlu0 6
      %1833 = vperm.xlu0 %1832, %v1495
      %v1834 = vpop.permute.xlu0 %1833
      %1836 = vset.pattern.permute.xlu0 6
      %1837 = vperm.xlu0 %1836, %v1496
      %v1838 = vpop.permute.xlu0 %1837
      %1840 = vset.pattern.permute.xlu0 6
      %1841 = vperm.xlu0 %1840, %v1497
      %v1842 = vpop.permute.xlu0 %1841
      %v1844 = vlaneseq
      %v1845 = vshrl.u32 %v1844, 7
      %v1846 = vsub.s32 6, %v1845
      %v1847 = vrot.slane %v1498, %v1846
      %v1848 = vmul.f32 %v1814, %v1847
      %v1849 = vmul.f32 %v1818, %v1847
      %v1850 = vmul.f32 %v1822, %v1847
      %v1851 = vmul.f32 %v1826, %v1847
      %v1852 = vmul.f32 %v1830, %v1847
      %v1853 = vmul.f32 %v1834, %v1847
      %v1854 = vmul.f32 %v1838, %v1847
      %v1855 = vmul.f32 %v1842, %v1847
      %v1856 = vadd.f32 %v1804, %v1848
      %v1857 = vadd.f32 %v1805, %v1849
      %v1858 = vadd.f32 %v1806, %v1850
      %v1859 = vadd.f32 %v1807, %v1851
      %v1860 = vadd.f32 %v1808, %v1852
      %v1861 = vadd.f32 %v1809, %v1853
      %v1862 = vadd.f32 %v1810, %v1854
      %v1863 = vadd.f32 %v1811, %v1855
      %1864 = vset.pattern.permute.xlu0 7
      %1865 = vperm.xlu0 %1864, %v1490
      %v1866 = vpop.permute.xlu0 %1865
      %1868 = vset.pattern.permute.xlu0 7
      %1869 = vperm.xlu0 %1868, %v1491
      %v1870 = vpop.permute.xlu0 %1869
      %1872 = vset.pattern.permute.xlu0 7
      %1873 = vperm.xlu0 %1872, %v1492
      %v1874 = vpop.permute.xlu0 %1873
      %1876 = vset.pattern.permute.xlu0 7
      %1877 = vperm.xlu0 %1876, %v1493
      %v1878 = vpop.permute.xlu0 %1877
      %1880 = vset.pattern.permute.xlu0 7
      %1881 = vperm.xlu0 %1880, %v1494
      %v1882 = vpop.permute.xlu0 %1881
      %1884 = vset.pattern.permute.xlu0 7
      %1885 = vperm.xlu0 %1884, %v1495
      %v1886 = vpop.permute.xlu0 %1885
      %1888 = vset.pattern.permute.xlu0 7
      %1889 = vperm.xlu0 %1888, %v1496
      %v1890 = vpop.permute.xlu0 %1889
      %1892 = vset.pattern.permute.xlu0 7
      %1893 = vperm.xlu0 %1892, %v1497
      %v1894 = vpop.permute.xlu0 %1893
      %v1896 = vlaneseq
      %v1897 = vshrl.u32 %v1896, 7
      %v1898 = vsub.s32 7, %v1897
      %v1899 = vrot.slane %v1498, %v1898
      %v1900 = vmul.f32 %v1866, %v1899
      %v1901 = vmul.f32 %v1870, %v1899
      %v1902 = vmul.f32 %v1874, %v1899
      %v1903 = vmul.f32 %v1878, %v1899
      %v1904 = vmul.f32 %v1882, %v1899
      %v1905 = vmul.f32 %v1886, %v1899
      %v1906 = vmul.f32 %v1890, %v1899
      %v1907 = vmul.f32 %v1894, %v1899
      %v1908 = vadd.f32 %v1856, %v1900
      %v1909 = vadd.f32 %v1857, %v1901
      %v1910 = vadd.f32 %v1858, %v1902
      %v1911 = vadd.f32 %v1859, %v1903
      %v1912 = vadd.f32 %v1860, %v1904
      %v1913 = vadd.f32 %v1861, %v1905
      %v1914 = vadd.f32 %v1862, %v1906
      %v1915 = vadd.f32 %v1863, %v1907
      %1916 = vset.pattern.permute.xlu0 8
      %1917 = vperm.xlu0 %1916, %v1490
      %v1918 = vpop.permute.xlu0 %1917
      %1920 = vset.pattern.permute.xlu0 8
      %1921 = vperm.xlu0 %1920, %v1491
      %v1922 = vpop.permute.xlu0 %1921
      %1924 = vset.pattern.permute.xlu0 8
      %1925 = vperm.xlu0 %1924, %v1492
      %v1926 = vpop.permute.xlu0 %1925
      %1928 = vset.pattern.permute.xlu0 8
      %1929 = vperm.xlu0 %1928, %v1493
      %v1930 = vpop.permute.xlu0 %1929
      %1932 = vset.pattern.permute.xlu0 8
      %1933 = vperm.xlu0 %1932, %v1494
      %v1934 = vpop.permute.xlu0 %1933
      %1936 = vset.pattern.permute.xlu0 8
      %1937 = vperm.xlu0 %1936, %v1495
      %v1938 = vpop.permute.xlu0 %1937
      %1940 = vset.pattern.permute.xlu0 8
      %1941 = vperm.xlu0 %1940, %v1496
      %v1942 = vpop.permute.xlu0 %1941
      %1944 = vset.pattern.permute.xlu0 8
      %1945 = vperm.xlu0 %1944, %v1497
      %v1946 = vpop.permute.xlu0 %1945
      %v1948 = vlaneseq
      %v1949 = vshrl.u32 %v1948, 7
      %v1950 = vsub.s32 0, %v1949
      %v1951 = vrot.slane %v1499, %v1950
      %v1952 = vmul.f32 %v1918, %v1951
      %v1953 = vmul.f32 %v1922, %v1951
      %v1954 = vmul.f32 %v1926, %v1951
      %v1955 = vmul.f32 %v1930, %v1951
      %v1956 = vmul.f32 %v1934, %v1951
      %v1957 = vmul.f32 %v1938, %v1951
      %v1958 = vmul.f32 %v1942, %v1951
      %v1959 = vmul.f32 %v1946, %v1951
      %v1960 = vadd.f32 %v1908, %v1952
      %v1961 = vadd.f32 %v1909, %v1953
      %v1962 = vadd.f32 %v1910, %v1954
      %v1963 = vadd.f32 %v1911, %v1955
      %v1964 = vadd.f32 %v1912, %v1956
      %v1965 = vadd.f32 %v1913, %v1957
      %v1966 = vadd.f32 %v1914, %v1958
      %v1967 = vadd.f32 %v1915, %v1959
      %1968 = vset.pattern.permute.xlu0 9
      %1969 = vperm.xlu0 %1968, %v1490
      %v1970 = vpop.permute.xlu0 %1969
      %1972 = vset.pattern.permute.xlu0 9
      %1973 = vperm.xlu0 %1972, %v1491
      %v1974 = vpop.permute.xlu0 %1973
      %1976 = vset.pattern.permute.xlu0 9
      %1977 = vperm.xlu0 %1976, %v1492
      %v1978 = vpop.permute.xlu0 %1977
      %1980 = vset.pattern.permute.xlu0 9
      %1981 = vperm.xlu0 %1980, %v1493
      %v1982 = vpop.permute.xlu0 %1981
      %1984 = vset.pattern.permute.xlu0 9
      %1985 = vperm.xlu0 %1984, %v1494
      %v1986 = vpop.permute.xlu0 %1985
      %1988 = vset.pattern.permute.xlu0 9
      %1989 = vperm.xlu0 %1988, %v1495
      %v1990 = vpop.permute.xlu0 %1989
      %1992 = vset.pattern.permute.xlu0 9
      %1993 = vperm.xlu0 %1992, %v1496
      %v1994 = vpop.permute.xlu0 %1993
      %1996 = vset.pattern.permute.xlu0 9
      %1997 = vperm.xlu0 %1996, %v1497
      %v1998 = vpop.permute.xlu0 %1997
      %v2000 = vlaneseq
      %v2001 = vshrl.u32 %v2000, 7
      %v2002 = vsub.s32 1, %v2001
      %v2003 = vrot.slane %v1499, %v2002
      %v2004 = vmul.f32 %v1970, %v2003
      %v2005 = vmul.f32 %v1974, %v2003
      %v2006 = vmul.f32 %v1978, %v2003
      %v2007 = vmul.f32 %v1982, %v2003
      %v2008 = vmul.f32 %v1986, %v2003
      %v2009 = vmul.f32 %v1990, %v2003
      %v2010 = vmul.f32 %v1994, %v2003
      %v2011 = vmul.f32 %v1998, %v2003
      %v2012 = vadd.f32 %v1960, %v2004
      %v2013 = vadd.f32 %v1961, %v2005
      %v2014 = vadd.f32 %v1962, %v2006
      %v2015 = vadd.f32 %v1963, %v2007
      %v2016 = vadd.f32 %v1964, %v2008
      %v2017 = vadd.f32 %v1965, %v2009
      %v2018 = vadd.f32 %v1966, %v2010
      %v2019 = vadd.f32 %v1967, %v2011
      %2020 = vset.pattern.permute.xlu0 10
      %2021 = vperm.xlu0 %2020, %v1490
      %v2022 = vpop.permute.xlu0 %2021
      %2024 = vset.pattern.permute.xlu0 10
      %2025 = vperm.xlu0 %2024, %v1491
      %v2026 = vpop.permute.xlu0 %2025
      %2028 = vset.pattern.permute.xlu0 10
      %2029 = vperm.xlu0 %2028, %v1492
      %v2030 = vpop.permute.xlu0 %2029
      %2032 = vset.pattern.permute.xlu0 10
      %2033 = vperm.xlu0 %2032, %v1493
      %v2034 = vpop.permute.xlu0 %2033
      %2036 = vset.pattern.permute.xlu0 10
      %2037 = vperm.xlu0 %2036, %v1494
      %v2038 = vpop.permute.xlu0 %2037
      %2040 = vset.pattern.permute.xlu0 10
      %2041 = vperm.xlu0 %2040, %v1495
      %v2042 = vpop.permute.xlu0 %2041
      %2044 = vset.pattern.permute.xlu0 10
      %2045 = vperm.xlu0 %2044, %v1496
      %v2046 = vpop.permute.xlu0 %2045
      %2048 = vset.pattern.permute.xlu0 10
      %2049 = vperm.xlu0 %2048, %v1497
      %v2050 = vpop.permute.xlu0 %2049
      %v2052 = vlaneseq
      %v2053 = vshrl.u32 %v2052, 7
      %v2054 = vsub.s32 2, %v2053
      %v2055 = vrot.slane %v1499, %v2054
      %v2056 = vmul.f32 %v2022, %v2055
      %v2057 = vmul.f32 %v2026, %v2055
      %v2058 = vmul.f32 %v2030, %v2055
      %v2059 = vmul.f32 %v2034, %v2055
      %v2060 = vmul.f32 %v2038, %v2055
      %v2061 = vmul.f32 %v2042, %v2055
      %v2062 = vmul.f32 %v2046, %v2055
      %v2063 = vmul.f32 %v2050, %v2055
      %v2064 = vadd.f32 %v2012, %v2056
      %v2065 = vadd.f32 %v2013, %v2057
      %v2066 = vadd.f32 %v2014, %v2058
      %v2067 = vadd.f32 %v2015, %v2059
      %v2068 = vadd.f32 %v2016, %v2060
      %v2069 = vadd.f32 %v2017, %v2061
      %v2070 = vadd.f32 %v2018, %v2062
      %v2071 = vadd.f32 %v2019, %v2063
      %2072 = vset.pattern.permute.xlu0 11
      %2073 = vperm.xlu0 %2072, %v1490
      %v2074 = vpop.permute.xlu0 %2073
      %2076 = vset.pattern.permute.xlu0 11
      %2077 = vperm.xlu0 %2076, %v1491
      %v2078 = vpop.permute.xlu0 %2077
      %2080 = vset.pattern.permute.xlu0 11
      %2081 = vperm.xlu0 %2080, %v1492
      %v2082 = vpop.permute.xlu0 %2081
      %2084 = vset.pattern.permute.xlu0 11
      %2085 = vperm.xlu0 %2084, %v1493
      %v2086 = vpop.permute.xlu0 %2085
      %2088 = vset.pattern.permute.xlu0 11
      %2089 = vperm.xlu0 %2088, %v1494
      %v2090 = vpop.permute.xlu0 %2089
      %2092 = vset.pattern.permute.xlu0 11
      %2093 = vperm.xlu0 %2092, %v1495
      %v2094 = vpop.permute.xlu0 %2093
      %2096 = vset.pattern.permute.xlu0 11
      %2097 = vperm.xlu0 %2096, %v1496
      %v2098 = vpop.permute.xlu0 %2097
      %2100 = vset.pattern.permute.xlu0 11
      %2101 = vperm.xlu0 %2100, %v1497
      %v2102 = vpop.permute.xlu0 %2101
      %v2104 = vlaneseq
      %v2105 = vshrl.u32 %v2104, 7
      %v2106 = vsub.s32 3, %v2105
      %v2107 = vrot.slane %v1499, %v2106
      %v2108 = vmul.f32 %v2074, %v2107
      %v2109 = vmul.f32 %v2078, %v2107
      %v2110 = vmul.f32 %v2082, %v2107
      %v2111 = vmul.f32 %v2086, %v2107
      %v2112 = vmul.f32 %v2090, %v2107
      %v2113 = vmul.f32 %v2094, %v2107
      %v2114 = vmul.f32 %v2098, %v2107
      %v2115 = vmul.f32 %v2102, %v2107
      %v2116 = vadd.f32 %v2064, %v2108
      %v2117 = vadd.f32 %v2065, %v2109
      %v2118 = vadd.f32 %v2066, %v2110
      %v2119 = vadd.f32 %v2067, %v2111
      %v2120 = vadd.f32 %v2068, %v2112
      %v2121 = vadd.f32 %v2069, %v2113
      %v2122 = vadd.f32 %v2070, %v2114
      %v2123 = vadd.f32 %v2071, %v2115
      %2124 = vset.pattern.permute.xlu0 12
      %2125 = vperm.xlu0 %2124, %v1490
      %v2126 = vpop.permute.xlu0 %2125
      %2128 = vset.pattern.permute.xlu0 12
      %2129 = vperm.xlu0 %2128, %v1491
      %v2130 = vpop.permute.xlu0 %2129
      %2132 = vset.pattern.permute.xlu0 12
      %2133 = vperm.xlu0 %2132, %v1492
      %v2134 = vpop.permute.xlu0 %2133
      %2136 = vset.pattern.permute.xlu0 12
      %2137 = vperm.xlu0 %2136, %v1493
      %v2138 = vpop.permute.xlu0 %2137
      %2140 = vset.pattern.permute.xlu0 12
      %2141 = vperm.xlu0 %2140, %v1494
      %v2142 = vpop.permute.xlu0 %2141
      %2144 = vset.pattern.permute.xlu0 12
      %2145 = vperm.xlu0 %2144, %v1495
      %v2146 = vpop.permute.xlu0 %2145
      %2148 = vset.pattern.permute.xlu0 12
      %2149 = vperm.xlu0 %2148, %v1496
      %v2150 = vpop.permute.xlu0 %2149
      %2152 = vset.pattern.permute.xlu0 12
      %2153 = vperm.xlu0 %2152, %v1497
      %v2154 = vpop.permute.xlu0 %2153
      %v2156 = vlaneseq
      %v2157 = vshrl.u32 %v2156, 7
      %v2158 = vsub.s32 4, %v2157
      %v2159 = vrot.slane %v1499, %v2158
      %v2160 = vmul.f32 %v2126, %v2159
      %v2161 = vmul.f32 %v2130, %v2159
      %v2162 = vmul.f32 %v2134, %v2159
      %v2163 = vmul.f32 %v2138, %v2159
      %v2164 = vmul.f32 %v2142, %v2159
      %v2165 = vmul.f32 %v2146, %v2159
      %v2166 = vmul.f32 %v2150, %v2159
      %v2167 = vmul.f32 %v2154, %v2159
      %v2168 = vadd.f32 %v2116, %v2160
      %v2169 = vadd.f32 %v2117, %v2161
      %v2170 = vadd.f32 %v2118, %v2162
      %v2171 = vadd.f32 %v2119, %v2163
      %v2172 = vadd.f32 %v2120, %v2164
      %v2173 = vadd.f32 %v2121, %v2165
      %v2174 = vadd.f32 %v2122, %v2166
      %v2175 = vadd.f32 %v2123, %v2167
      %2176 = vset.pattern.permute.xlu0 13
      %2177 = vperm.xlu0 %2176, %v1490
      %v2178 = vpop.permute.xlu0 %2177
      %2180 = vset.pattern.permute.xlu0 13
      %2181 = vperm.xlu0 %2180, %v1491
      %v2182 = vpop.permute.xlu0 %2181
      %2184 = vset.pattern.permute.xlu0 13
      %2185 = vperm.xlu0 %2184, %v1492
      %v2186 = vpop.permute.xlu0 %2185
      %2188 = vset.pattern.permute.xlu0 13
      %2189 = vperm.xlu0 %2188, %v1493
      %v2190 = vpop.permute.xlu0 %2189
      %2192 = vset.pattern.permute.xlu0 13
      %2193 = vperm.xlu0 %2192, %v1494
      %v2194 = vpop.permute.xlu0 %2193
      %2196 = vset.pattern.permute.xlu0 13
      %2197 = vperm.xlu0 %2196, %v1495
      %v2198 = vpop.permute.xlu0 %2197
      %2200 = vset.pattern.permute.xlu0 13
      %2201 = vperm.xlu0 %2200, %v1496
      %v2202 = vpop.permute.xlu0 %2201
      %2204 = vset.pattern.permute.xlu0 13
      %2205 = vperm.xlu0 %2204, %v1497
      %v2206 = vpop.permute.xlu0 %2205
      %v2208 = vlaneseq
      %v2209 = vshrl.u32 %v2208, 7
      %v2210 = vsub.s32 5, %v2209
      %v2211 = vrot.slane %v1499, %v2210
      %v2212 = vmul.f32 %v2178, %v2211
      %v2213 = vmul.f32 %v2182, %v2211
      %v2214 = vmul.f32 %v2186, %v2211
      %v2215 = vmul.f32 %v2190, %v2211
      %v2216 = vmul.f32 %v2194, %v2211
      %v2217 = vmul.f32 %v2198, %v2211
      %v2218 = vmul.f32 %v2202, %v2211
      %v2219 = vmul.f32 %v2206, %v2211
      %v2220 = vadd.f32 %v2168, %v2212
      %v2221 = vadd.f32 %v2169, %v2213
      %v2222 = vadd.f32 %v2170, %v2214
      %v2223 = vadd.f32 %v2171, %v2215
      %v2224 = vadd.f32 %v2172, %v2216
      %v2225 = vadd.f32 %v2173, %v2217
      %v2226 = vadd.f32 %v2174, %v2218
      %v2227 = vadd.f32 %v2175, %v2219
      %2228 = vset.pattern.permute.xlu0 14
      %2229 = vperm.xlu0 %2228, %v1490
      %v2230 = vpop.permute.xlu0 %2229
      %2232 = vset.pattern.permute.xlu0 14
      %2233 = vperm.xlu0 %2232, %v1491
      %v2234 = vpop.permute.xlu0 %2233
      %2236 = vset.pattern.permute.xlu0 14
      %2237 = vperm.xlu0 %2236, %v1492
      %v2238 = vpop.permute.xlu0 %2237
      %2240 = vset.pattern.permute.xlu0 14
      %2241 = vperm.xlu0 %2240, %v1493
      %v2242 = vpop.permute.xlu0 %2241
      %2244 = vset.pattern.permute.xlu0 14
      %2245 = vperm.xlu0 %2244, %v1494
      %v2246 = vpop.permute.xlu0 %2245
      %2248 = vset.pattern.permute.xlu0 14
      %2249 = vperm.xlu0 %2248, %v1495
      %v2250 = vpop.permute.xlu0 %2249
      %2252 = vset.pattern.permute.xlu0 14
      %2253 = vperm.xlu0 %2252, %v1496
      %v2254 = vpop.permute.xlu0 %2253
      %2256 = vset.pattern.permute.xlu0 14
      %2257 = vperm.xlu0 %2256, %v1497
      %v2258 = vpop.permute.xlu0 %2257
      %v2260 = vlaneseq
      %v2261 = vshrl.u32 %v2260, 7
      %v2262 = vsub.s32 6, %v2261
      %v2263 = vrot.slane %v1499, %v2262
      %v2264 = vmul.f32 %v2230, %v2263
      %v2265 = vmul.f32 %v2234, %v2263
      %v2266 = vmul.f32 %v2238, %v2263
      %v2267 = vmul.f32 %v2242, %v2263
      %v2268 = vmul.f32 %v2246, %v2263
      %v2269 = vmul.f32 %v2250, %v2263
      %v2270 = vmul.f32 %v2254, %v2263
      %v2271 = vmul.f32 %v2258, %v2263
      %v2272 = vadd.f32 %v2220, %v2264
      %v2273 = vadd.f32 %v2221, %v2265
      %v2274 = vadd.f32 %v2222, %v2266
      %v2275 = vadd.f32 %v2223, %v2267
      %v2276 = vadd.f32 %v2224, %v2268
      %v2277 = vadd.f32 %v2225, %v2269
      %v2278 = vadd.f32 %v2226, %v2270
      %v2279 = vadd.f32 %v2227, %v2271
      %2280 = vset.pattern.permute.xlu0 15
      %2281 = vperm.xlu0 %2280, %v1490
      %v2282 = vpop.permute.xlu0 %2281
      %2284 = vset.pattern.permute.xlu0 15
      %2285 = vperm.xlu0 %2284, %v1491
      %v2286 = vpop.permute.xlu0 %2285
      %2288 = vset.pattern.permute.xlu0 15
      %2289 = vperm.xlu0 %2288, %v1492
      %v2290 = vpop.permute.xlu0 %2289
      %2292 = vset.pattern.permute.xlu0 15
      %2293 = vperm.xlu0 %2292, %v1493
      %v2294 = vpop.permute.xlu0 %2293
      %2296 = vset.pattern.permute.xlu0 15
      %2297 = vperm.xlu0 %2296, %v1494
      %v2298 = vpop.permute.xlu0 %2297
      %2300 = vset.pattern.permute.xlu0 15
      %2301 = vperm.xlu0 %2300, %v1495
      %v2302 = vpop.permute.xlu0 %2301
      %2304 = vset.pattern.permute.xlu0 15
      %2305 = vperm.xlu0 %2304, %v1496
      %v2306 = vpop.permute.xlu0 %2305
      %2308 = vset.pattern.permute.xlu0 15
      %2309 = vperm.xlu0 %2308, %v1497
      %v2310 = vpop.permute.xlu0 %2309
      %v2312 = vlaneseq
      %v2313 = vshrl.u32 %v2312, 7
      %v2314 = vsub.s32 7, %v2313
      %v2315 = vrot.slane %v1499, %v2314
      %v2316 = vmul.f32 %v2282, %v2315
      %v2317 = vmul.f32 %v2286, %v2315
      %v2318 = vmul.f32 %v2290, %v2315
      %v2319 = vmul.f32 %v2294, %v2315
      %v2320 = vmul.f32 %v2298, %v2315
      %v2321 = vmul.f32 %v2302, %v2315
      %v2322 = vmul.f32 %v2306, %v2315
      %v2323 = vmul.f32 %v2310, %v2315
      %v2324 = vadd.f32 %v2272, %v2316
      %v2325 = vadd.f32 %v2273, %v2317
      %v2326 = vadd.f32 %v2274, %v2318
      %v2327 = vadd.f32 %v2275, %v2319
      %v2328 = vadd.f32 %v2276, %v2320
      %v2329 = vadd.f32 %v2277, %v2321
      %v2330 = vadd.f32 %v2278, %v2322
      %v2331 = vadd.f32 %v2279, %v2323
      %v2332 = vld [vmem:[%s8] sm:$0x1]
      %v2334 = vlaneseq
      %v2335 = vshrl.u32 %v2334, 7
      %v2336 = vsub.s32 0, %v2335
      %v2337 = vrot.slane %v2332, %v2336
      %v2339 = vmul.f32 %v2324, %v2337
      %v2340 = vmul.f32 %v2325, %v2337
      %v2341 = vmul.f32 %v2326, %v2337
      %v2342 = vmul.f32 %v2327, %v2337
      %v2343 = vmul.f32 %v2328, %v2337
      %v2344 = vmul.f32 %v2329, %v2337
      %v2345 = vmul.f32 %v2330, %v2337
      %v2346 = vmul.f32 %v2331, %v2337
      %v2347 = vld [vmem:[%s9] sm:$0x1]
      %v2349 = vlaneseq
      %v2350 = vshrl.u32 %v2349, 7
      %v2351 = vsub.s32 0, %v2350
      %v2352 = vrot.slane %v2347, %v2351
      %v2354 = vadd.f32 %v2339, %v2352
      %v2355 = vadd.f32 %v2340, %v2352
      %v2356 = vadd.f32 %v2341, %v2352
      %v2357 = vadd.f32 %v2342, %v2352
      %v2358 = vadd.f32 %v2343, %v2352
      %v2359 = vadd.f32 %v2344, %v2352
      %v2360 = vadd.f32 %v2345, %v2352
      %v2361 = vadd.f32 %v2346, %v2352
      %v2362 = vrot.slane %v391, 1
      %v2363 = vrot.slane %v392, 1
      %v2364 = vsel %vm1102, %v2362, %v2363
      %v2365 = vrot.slane %v393, 1
      %v2366 = vsel %vm1102, %v2363, %v2365
      %v2367 = vrot.slane %v394, 1
      %v2368 = vrot.slane %v395, 1
      %v2369 = vsel %vm1102, %v2367, %v2368
      %v2370 = vrot.slane %v396, 1
      %v2371 = vsel %vm1102, %v2368, %v2370
      %v2372 = vrot.slane %v397, 1
      %v2373 = vrot.slane %v398, 1
      %v2374 = vsel %vm1102, %v2372, %v2373
      %v2375 = vrot.slane %v399, 1
      %v2376 = vsel %vm1102, %v2373, %v2375
      %v2377 = vrot.slane %v400, 1
      %v2378 = vrot.slane %v401, 1
      %v2379 = vsel %vm1102, %v2377, %v2378
      %v2380 = vrot.slane %v402, 1
      %v2381 = vsel %vm1102, %v2378, %v2380
      %v2390 = vadd.f32 %v2354, %v2364
      %v2391 = vadd.f32 %v2355, %v2366
      %v2392 = vadd.f32 %v2356, %v2369
      %v2393 = vadd.f32 %v2357, %v2371
      %v2394 = vadd.f32 %v2358, %v2374
      %v2395 = vadd.f32 %v2359, %v2376
      %v2396 = vadd.f32 %v2360, %v2379
      %v2397 = vadd.f32 %v2361, %v2381
      %v2398 = vmax.f32 %v2390, 0.0
      %v2399 = vmax.f32 %v2391, 0.0
      %v2400 = vmax.f32 %v2392, 0.0
      %v2401 = vmax.f32 %v2393, 0.0
      %v2402 = vmax.f32 %v2394, 0.0
      %v2403 = vmax.f32 %v2395, 0.0
      %v2404 = vmax.f32 %v2396, 0.0
      %v2405 = vmax.f32 %v2397, 0.0
      %vm2406 = vcmask 31744
      %2407 = vst.msk [vmem:[%s383] sm:$0xff] %vm2406, %v2398
      %2408 = vst.msk [vmem:[%s383 + $0x8] sm:$0xff] %vm2406, %v2399
      %2409 = vst.msk [vmem:[%s383 + $0x10] sm:$0xff] %vm2406, %v2400
      %2410 = vst.msk [vmem:[%s383 + $0x18] sm:$0xff] %vm2406, %v2401
      %2411 = vst.msk [vmem:[%s383 + $0x20] sm:$0xff] %vm2406, %v2402
      %2412 = vst.msk [vmem:[%s383 + $0x28] sm:$0xff] %vm2406, %v2403
      %2413 = vst.msk [vmem:[%s383 + $0x30] sm:$0xff] %vm2406, %v2404
      %2414 = vst.msk [vmem:[%s383 + $0x38] sm:$0xff] %vm2406, %v2405
      %s2415 = smul.u32 4, %s26
      %p2416 = scmp.lt.s32.totalorder %s25, 1
      %s2417 = scalar_select %p2416, %s25, 1
      %p2418 = scmp.lt.s32.totalorder %s2415, 15
      %s2419 = scalar_select %p2418, %s2415, 15
      %s2420 = smul.addr %s2419, 2
      %s2421 = smul.addr %s2417, 32
      %s2422 = sadd.s32 %s2420, %s2421
      %s2423 = smul.addr %s2422, 8
      %s2424 = scalar_lea.vmem %s10, %s2423
      // Predicated region
      $region61: #{tpu_custom_call.1} parent=59 // pred_check
        %p2425 = pneg %p268
      $region62: #{tpu_custom_call.1} parent=59 // pred_check_branch
        %2427 = sbr.rel (%p2425) target = $region64
      $region63: #{tpu_custom_call.1} parent=59 // pred_region
        %s2428 = smul.u32 4, %s26
      $region64: #{tpu_custom_call.1} parent=59 // pred_fallthru
        _
    $region60: #{tpu_custom_call.1} parent=5 // pred_fallthru
      _
    %p2429 = scmp.le.s32.totalorder 2, %s16
    // Predicated region
    $region65: #{tpu_custom_call.1} parent=5 // pred_check
      %p2430 = pneg %p2429
    $region66: #{tpu_custom_call.1} parent=5 // pred_check_branch
      %2432 = sbr.rel (%p2430) target = $region68
    $region67: #{tpu_custom_call.1} parent=5 // pred_region
      %s2433 = ssub.s32 %s16, 2
      // Predicated region
      $region69: #{tpu_custom_call.1} parent=67 // pred_check
        %p2434 = pneg %p274
      $region70: #{tpu_custom_call.1} parent=67 // pred_check_branch
        %2436 = sbr.rel (%p2434) target = $region72
      $region71: #{tpu_custom_call.1} parent=67 // pred_region
        %s2437 = smul.u32 4, %s28
        %p2438 = scmp.lt.s32.totalorder %s27, 1
        %s2439 = scalar_select %p2438, %s27, 1
        %p2440 = scmp.lt.s32.totalorder %s2437, 15
        %s2441 = scalar_select %p2440, %s2437, 15
        %s2442 = smul.addr %s2441, 2
        %s2443 = smul.addr %s2439, 32
        %s2444 = sadd.s32 %s2442, %s2443
        %s2445 = smul.addr %s2444, 8
        %s2446 = scalar_lea.vmem %s10, %s2445
      $region72: #{tpu_custom_call.1} parent=67 // pred_fallthru
        _
    $region68: #{tpu_custom_call.1} parent=5 // pred_fallthru
      _
  $region6: #{tpu_custom_call.1} parent=0 // loop_footer
    %s20 = sadd.s32 1, %s16
  $region7: #{tpu_custom_call.1} parent=0 // loop_footer_branch
    %15 = sbr.rel target = $region3
  $region8: #{tpu_custom_call.1} parent=0 // loop_exit
    _

</llo_original>
